<compile_context>
chip_gen: v6e
topology: v6e:2x2x1
jax: 0.10.0
libtpu: 0.0.40
codegen_flags: <defaults>
</compile_context>

<pallas_src>
import math

import jax
import jax.numpy as jnp
import numpy as np
from jax.experimental import pallas as pl
from jax.experimental.pallas import tpu as pltpu

# ----------------------------- configuration --------------------------------
B = 2          # number of graphs (batch)
G = 4          # number of active genes (= max_genes_per_clone used here)
H = 32         # cfg.hidden_dim
NH = 4         # cfg.num_heads
HD = H // NH   # per-head dim
F = 16         # node feature dim
NODES = 8      # nodes per graph
BG = B * G     # rows of the fused (batch, gene) layout
LANES = 128    # TPU lane width; parameter slab / output are 128 lanes wide
EPS = 1e-5     # LayerNorm eps (PyTorch default)


# ------------------------------- kernel --------------------------------------
def make_kernel(off):
  """off: dict name -> 8-aligned starting row inside the packed param slab."""

  def kernel(pooled_ref, p_ref, out_ref):
    f32 = jnp.float32

    def blk(name, rows, lanes):
      r = off[name]                              # static, multiple of 8
      return p_ref[r:r + rows, 0:lanes]

    def layer_norm(v, gname, bname):
      w = v.shape[-1]
      mu = jnp.mean(v, axis=-1, keepdims=True)
      var = jnp.mean((v - mu) ** 2, axis=-1, keepdims=True)
      return ((v - mu) * jax.lax.rsqrt(var + EPS) * blk(gname, 1, w)
              + blk(bname, 1, w))

    # ---- gene modules: every gene of every graph in ONE matmul --------------
    # pooled_bd[b*G+g, g*F:(g+1)*F] = pooled[b]; one [BG,G*F]@[G*F,H] dot gives
    # gene_g(pooled_b) on row b*G+g.
    pooled_bd = pooled_ref[...]                                     # [BG, G*F]
    gene = (jnp.dot(pooled_bd, blk('gene_w', G * F, H),
                    preferred_element_type=f32)
            + blk('gene_b', BG, H))                                 # [BG, H]

    # ---- gene regulation: sigmoid(reg @ act) as VPU mul + lane reduce -------
    gate = jax.nn.sigmoid(
        jnp.sum(blk('reg', BG, G) * blk('act', 1, G),
                axis=-1, keepdims=True))                            # [BG, 1]
    x = gene * gate                                                 # [BG, H]

    # ---- multi-head self-attention, all 4 heads lane-stacked ----------------
    # q-third of wqkv / bqkv already carries the 1/sqrt(HD) scale.
    qkv = (jnp.dot(x, blk('wqkv', H, 3 * H), preferred_element_type=f32)
           + blk('bqkv', 1, 3 * H))                                 # [BG, 3H]
    q_all = qkv[:, 0:H]
    k_all = qkv[:, H:2 * H]
    v_all = qkv[:, 2 * H:3 * H]

    # Head block-diagonal key/value slabs: row j holds key/value j%BG masked to
    # the lanes of head j//BG.
    hv_mask = blk('hvmask', NH * BG, H)                             # [32, 32]
    k_bd = jnp.concatenate([k_all] * NH, axis=0) * hv_mask          # [NH*BG, H]
    v_bd = jnp.concatenate([v_all] * NH, axis=0) * hv_mask          # [NH*BG, H]

    # scores for all heads: column block h = q_h @ k_h^T, plus precomputed
    # graph block-diagonal -1e30 mask (genes attend within their own graph).
    s = jax.lax.dot_general(q_all, k_bd, (((1,), (1,)), ((), ())),
                            preferred_element_type=f32)             # [BG, NH*BG]
    s = s + blk('negmask', BG, NH * BG)

    # one exp pass; per-segment softmax is invariant to the global row max.
    e = jnp.exp(s - jnp.max(s, axis=-1, keepdims=True))             # [BG, NH*BG]
    denom = jnp.dot(e, blk('segones', NH * BG, NH * BG),
                    preferred_element_type=f32)                     # per-head sums
    p = e / denom                                                   # softmax, all heads

    ctx = jnp.dot(p, v_bd, preferred_element_type=f32)              # [BG, H]
    attn_avg = jnp.dot(p, blk('avgmat', NH * BG, BG),
                       preferred_element_type=f32)                  # [BG, BG]
    integrated = (jnp.dot(ctx, blk('wo', H, H), preferred_element_type=f32)
                  + blk('bo', 1, H))                                # [BG, H]

    # ---- gene integrator: mean over genes as one constant-matrix matmul -----
    m = jnp.dot(blk('pool', B, BG), integrated,
                preferred_element_type=f32)                         # [B, H]
    h1 = (jnp.dot(m, blk('iw1', H, 2 * H), preferred_element_type=f32)
          + blk('ib1', 1, 2 * H))
    h1 = jax.nn.relu(layer_norm(h1, 'ig1', 'ibt1'))
    cell = layer_norm(
        jnp.dot(h1, blk('iw2', 2 * H, H), preferred_element_type=f32)
        + blk('ib2', 1, H), 'ig2', 'ibt2')                          # [B, H]

    # ---- affinity maturation head -------------------------------------------
    a1 = jax.nn.relu(layer_norm(
        jnp.dot(cell, blk('aw1', H, H), preferred_element_type=f32)
        + blk('ab1', 1, H), 'ag1', 'abt1'))
    a2 = jax.nn.relu(
        jnp.dot(a1, blk('aw2', H, H // 2), preferred_element_type=f32)
        + blk('ab2', 1, H // 2))
    aff = jax.nn.sigmoid(
        jnp.dot(a2, blk('aw3', H // 2, 1), preferred_element_type=f32)
        + blk('ab3', 1, 1))                                         # [B, 1]

    # ---- direct lane-offset stores (no in-kernel lane concat) ---------------
    out_ref[...] = jnp.zeros((BG, LANES), f32)        # zero unused rows/lanes
    out_ref[:, 0:BG] = attn_avg                       # lanes [0, BG)
    out_ref[0:B, 32:32 + H] = cell                    # lanes [32, 64), rows 0:B
    out_ref[0:B, 64:65] = aff                         # lane 64, rows 0:B

  return kernel


# --------------------------- host-side packing (once) ------------------------
def pack_params(weights):
  """Pack all constant module tensors into one 8-row-aligned [R,128] slab.

  Pure NumPy, executed once at setup; returns (params, static offsets).
  """
  (gene_w, gene_b, reg, act, wq, bq, wk, bk, wv, bv, wo, bo,
   iw1, ib1, ig1, ibt1, iw2, ib2, ig2, ibt2,
   aw1, ab1, ag1, abt1, aw2, ab2, aw3, ab3) = [
       np.asarray(w, np.float32) for w in weights]

  scale = 1.0 / math.sqrt(HD)
  wqkv = np.concatenate([wq.reshape(H, H).T * scale,        # scale folded in q
                         wk.reshape(H, H).T,
                         wv.reshape(H, H).T], axis=1)        # [H, 3H]
  bqkv = np.concatenate([bq.reshape(1, H) * scale,
                         bk.reshape(1, H),
                         bv.reshape(1, H)], axis=1)          # [1, 3H]

  # constant attention / pooling matrices
  j = np.arange(NH * BG)
  hvmask = (j[:, None] // BG == np.arange(H)[None, :] // HD).astype(np.float32)
  segones = (j[:, None] // BG == j[None, :] // BG).astype(np.float32)
  avgmat = ((j[:, None] % BG) == np.arange(BG)[None, :]).astype(np.float32) / NH
  same_graph = (np.arange(BG)[:, None] // G == np.arange(BG)[None, :] // G)
  negmask = np.tile(np.where(same_graph, 0.0, -1e30).astype(np.float32), (1, NH))
  pool = (np.arange(BG)[None, :] // G
          == np.arange(B)[:, None]).astype(np.float32) / G   # [B, BG]

  blocks = [
      ('gene_w', gene_w.reshape(G * F, H)),          # stacked per-gene weights
      ('gene_b', np.tile(gene_b, (B, 1))),           # per-(batch, gene) bias
      ('reg',    np.tile(reg, (B, 1))),              # per-(batch, gene) reg row
      ('act',    act.reshape(1, G)),
      ('wqkv',   wqkv), ('bqkv', bqkv),
      ('wo',     np.transpose(wo, (0, 2, 1)).reshape(H, H)),
      ('bo',     bo.reshape(1, H)),
      ('hvmask', hvmask), ('negmask', negmask),
      ('segones', segones), ('avgmat', avgmat), ('pool', pool),
      ('iw1', iw1), ('ib1', ib1), ('ig1', ig1), ('ibt1', ibt1),
      ('iw2', iw2), ('ib2', ib2), ('ig2', ig2), ('ibt2', ibt2),
      ('aw1', aw1), ('ab1', ab1), ('ag1', ag1), ('abt1', abt1),
      ('aw2', aw2), ('ab2', ab2), ('aw3', aw3), ('ab3', ab3),
  ]

  off, slabs, r = {}, [], 0
  for name, a in blocks:
    a = a.reshape(1, -1) if a.ndim == 1 else a
    off[name] = r
    pad_r = (-a.shape[0]) % 8                 # 8-row (sublane tile) alignment
    slabs.append(np.pad(a, ((0, pad_r), (0, LANES - a.shape[1]))))
    r += a.shape[0] + pad_r
  params = jnp.asarray(np.concatenate(slabs, axis=0))     # [R, 128], R % 8 == 0
  return params, off


# ------------------------------ wrapper --------------------------------------
def make_forward(off):
  kernel = make_kernel(off)
  pcall = pl.pallas_call(
      kernel,
      out_shape=jax.ShapeDtypeStruct((BG, LANES), jnp.float32),
      in_specs=[pl.BlockSpec(memory_space=pltpu.MemorySpace.VMEM),
                pl.BlockSpec(memory_space=pltpu.MemorySpace.VMEM)],
      out_specs=pl.BlockSpec(memory_space=pltpu.MemorySpace.VMEM),
  )

  @jax.jit
  def forward(pooled, params):
    # data-dependent block-diagonal pooled slab: row b*G+g carries pooled[b]
    # in lane block g.
    eye = jnp.eye(G, dtype=jnp.float32)
    pooled_bd = (pooled[:, None, None, :]
                 * eye[None, :, :, None]).reshape(BG, G * F)        # [BG, G*F]
    out = pcall(pooled_bd, params)                                  # [BG, 128]
    attnw = jnp.stack(
        [out[b * G:(b + 1) * G, b * G:(b + 1) * G] for b in range(B)], axis=0)
    cell = out[0:B, 32:32 + H]
    aff = out[0:B, 64]                   # mirrors torch .squeeze() on [B, 1]
    return aff, cell, attnw

  return forward


# --------------------------- pure-JAX reference ------------------------------
def bcell_reference(pooled, weights):
  (gene_w, gene_b, reg, act, wq, bq, wk, bk, wv, bv, wo, bo,
   iw1, ib1, ig1, ibt1, iw2, ib2, ig2, ibt2,
   aw1, ab1, ag1, abt1, aw2, ab2, aw3, ab3) = weights

  def layer_norm(v, gamma, beta):
    mu = jnp.mean(v, axis=-1, keepdims=True)
    var = jnp.mean((v - mu) ** 2, axis=-1, keepdims=True)
    return (v - mu) / jnp.sqrt(var + EPS) * gamma + beta

  gene_stack = jnp.einsum('bf,gfh->gbh', pooled, gene_w) + gene_b[:, None, :]
  regulated = jax.nn.sigmoid(reg @ act)
  x = jnp.transpose(gene_stack * regulated[:, :, None], (1, 0, 2))

  scale = 1.0 / math.sqrt(HD)
  out_proj = jnp.zeros((B, G, H))
  attn_sum = jnp.zeros((B, G, G))
  for h in range(NH):
    qh = jnp.einsum('bgh,dh->bgd', x, wq[h]) + bq[h]
    kh = jnp.einsum('bgh,dh->bgd', x, wk[h]) + bk[h]
    vh = jnp.einsum('bgh,dh->bgd', x, wv[h]) + bv[h]
    p = jax.nn.softmax(jnp.einsum('bqd,bkd->bqk', qh, kh) * scale, axis=-1)
    attn_sum = attn_sum + p
    out_proj = out_proj + jnp.einsum('bqd,Hd->bqH',
                                     jnp.einsum('bqk,bkd->bqd', p, vh), wo[h])
  integrated = out_proj + bo
  m = jnp.mean(integrated, axis=1)
  h1 = jax.nn.relu(layer_norm(m @ iw1 + ib1, ig1, ibt1))
  cell = layer_norm(h1 @ iw2 + ib2, ig2, ibt2)
  a1 = jax.nn.relu(layer_norm(cell @ aw1 + ab1, ag1, abt1))
  a2 = jax.nn.relu(a1 @ aw2 + ab2)
  aff = jax.nn.sigmoid(a2 @ aw3 + ab3)
  return jnp.squeeze(aff), cell, attn_sum / float(NH)


# ------------------------------- main ----------------------------------------
if __name__ == "__main__":
  key = jax.random.PRNGKey(0)
  ks = list(jax.random.split(key, 32))
  nrm = lambda k, s, sc=0.05: (jax.random.normal(k, s) * sc).astype(jnp.float32)

  # antigen: node features + graph assignment (glue: graph mean pool)
  x_nodes = jax.random.normal(ks[0], (B * NODES, F), dtype=jnp.float32)
  batch_idx = jnp.repeat(jnp.arange(B), NODES)
  pooled = jax.ops.segment_sum(x_nodes, batch_idx, num_segments=B) / NODES

  # synthetic gene modules
  gene_w = nrm(ks[1], (G, F, H))
  gene_b = nrm(ks[2], (G, H))

  # gene regulation (forward-time randn reg matrix, activities default 1.0)
  reg = jax.random.normal(ks[3], (G, G), dtype=jnp.float32)
  act = jnp.ones((G, 1), jnp.float32)

  # nn.MultiheadAttention params, split per head (torch [out, in] layout)
  in_proj_w = nrm(ks[4], (3 * H, H))
  in_proj_b = nrm(ks[5], (3 * H,))
  wq = in_proj_w[0:H].reshape(NH, HD, H)
  wk = in_proj_w[H:2 * H].reshape(NH, HD, H)
  wv = in_proj_w[2 * H:3 * H].reshape(NH, HD, H)
  bq = in_proj_b[0:H].reshape(NH, HD)
  bk = in_proj_b[H:2 * H].reshape(NH, HD)
  bv = in_proj_b[2 * H:3 * H].reshape(NH, HD)
  out_proj_w = nrm(ks[6], (H, H))
  wo = jnp.transpose(out_proj_w.reshape(H, NH, HD), (1, 0, 2))   # [NH, H, HD]
  bo = nrm(ks[7], (1, H))

  # gene_integrator: Linear(H,2H) LN ReLU Dropout Linear(2H,H) LN
  iw1 = nrm(ks[8], (H, 2 * H))      # pre-transposed to [in, out]
  ib1 = nrm(ks[9], (1, 2 * H))
  ig1 = jnp.ones((1, 2 * H), jnp.float32)
  ibt1 = jnp.zeros((1, 2 * H), jnp.float32)
  iw2 = nrm(ks[10], (2 * H, H))
  ib2 = nrm(ks[11], (1, H))
  ig2 = jnp.ones((1, H), jnp.float32)
  ibt2 = jnp.zeros((1, H), jnp.float32)

  # affinity_maturation: Linear(H,H) LN ReLU Linear(H,H/2) ReLU Linear(H/2,1) Sigmoid
  aw1 = nrm(ks[12], (H, H))
  ab1 = nrm(ks[13], (1, H))
  ag1 = jnp.ones((1, H), jnp.float32)
  abt1 = jnp.zeros((1, H), jnp.float32)
  aw2 = nrm(ks[14], (H, H // 2))
  ab2 = nrm(ks[15], (1, H // 2))
  aw3 = nrm(ks[16], (H // 2, 1))
  ab3 = nrm(ks[17], (1, 1))

  weights = (gene_w, gene_b, reg, act, wq, bq, wk, bk, wv, bv, wo, bo,
             iw1, ib1, ig1, ibt1, iw2, ib2, ig2, ibt2,
             aw1, ab1, ag1, abt1, aw2, ab2, aw3, ab3)

  # Pack the constant parameter slab ONCE; only `pooled` varies per call.
  params, off = pack_params(weights)
  forward = make_forward(off)

  aff, cell, attnw = jax.block_until_ready(forward(pooled, params))
  aff_r, cell_r, attnw_r = bcell_reference(pooled, weights)

  np.testing.assert_allclose(np.asarray(aff), np.asarray(aff_r),
                             rtol=1e-4, atol=1e-4)
  np.testing.assert_allclose(np.asarray(cell), np.asarray(cell_r),
                             rtol=1e-4, atol=1e-4)
  np.testing.assert_allclose(np.asarray(attnw), np.asarray(attnw_r),
                             rtol=1e-4, atol=1e-4)
  assert aff.shape == (B,) and cell.shape == (B, H) and attnw.shape == (B, G, G)
  print("KERNEL_OK")
</pallas_src>

<mosaic_0001>
module attributes {stable_mosaic.version = 11 : i64} {
  func.func @kernel(%arg0: memref<8x64xf32, #tpu.memory_space<vmem>>, %arg1: memref<544x128xf32, #tpu.memory_space<vmem>>, %arg2: memref<8x128xf32, #tpu.memory_space<vmem>>) attributes {dimension_semantics = [], scalar_prefetch = 0 : i64, scratch_operands = 0 : i64, tpu.core_type = #tpu.core_type<tc>} {
    %c0 = arith.constant 0 : index
    %c0_0 = arith.constant 0 : index
    %0 = vector.load %arg0[%c0, %c0_0] : memref<8x64xf32, #tpu.memory_space<vmem>>, vector<8x64xf32>
    %c0_1 = arith.constant 0 : index
    %c0_2 = arith.constant 0 : index
    %1 = vector.load %arg1[%c0_1, %c0_2] : memref<544x128xf32, #tpu.memory_space<vmem>>, vector<64x32xf32>
    %cst = arith.constant dense<0.000000e+00> : vector<8x32xf32>
    %2 = tpu.matmul %0, %1, %cst {dimension_numbers = #tpu.dot_dimension_numbers<[1], [0], [0], [1], [0, 0, 1, 1], [], []>} : vector<8x64xf32>, vector<64x32xf32>, vector<8x32xf32> -> vector<8x32xf32>
    %c64 = arith.constant 64 : index
    %c0_3 = arith.constant 0 : index
    %3 = vector.load %arg1[%c64, %c0_3] : memref<544x128xf32, #tpu.memory_space<vmem>>, vector<8x32xf32>
    %4 = arith.addf %2, %3 : vector<8x32xf32>
    %c72 = arith.constant 72 : index
    %c0_4 = arith.constant 0 : index
    %5 = vector.load %arg1[%c72, %c0_4] : memref<544x128xf32, #tpu.memory_space<vmem>>, vector<8x4xf32>
    %c80 = arith.constant 80 : index
    %c0_5 = arith.constant 0 : index
    %6 = vector.load %arg1[%c80, %c0_5] : memref<544x128xf32, #tpu.memory_space<vmem>>, vector<1x4xf32>
    %7 = vector.broadcast %6 : vector<1x4xf32> to vector<8x4xf32>
    %8 = arith.mulf %5, %7 : vector<8x4xf32>
    %cst_6 = arith.constant dense<0.000000e+00> : vector<8xf32>
    %9 = vector.multi_reduction <add>, %8, %cst_6 [1] : vector<8x4xf32> to vector<8xf32>
    %10 = vector.shape_cast %9 : vector<8xf32> to vector<8x1xf32>
    %11 = arith.negf %10 : vector<8x1xf32>
    %12 = math.exp %11 : vector<8x1xf32>
    %cst_7 = arith.constant 1.000000e+00 : f32
    %13 = vector.broadcast %cst_7 : f32 to vector<8x1xf32>
    %14 = arith.addf %13, %12 : vector<8x1xf32>
    %15 = arith.divf %13, %14 : vector<8x1xf32>
    %16 = vector.broadcast %15 : vector<8x1xf32> to vector<8x32xf32>
    %17 = arith.mulf %4, %16 : vector<8x32xf32>
    %c88 = arith.constant 88 : index
    %c0_8 = arith.constant 0 : index
    %18 = vector.load %arg1[%c88, %c0_8] : memref<544x128xf32, #tpu.memory_space<vmem>>, vector<32x96xf32>
    %cst_9 = arith.constant dense<0.000000e+00> : vector<8x96xf32>
    %19 = tpu.matmul %17, %18, %cst_9 {dimension_numbers = #tpu.dot_dimension_numbers<[1], [0], [0], [1], [0, 0, 1, 1], [], []>} : vector<8x32xf32>, vector<32x96xf32>, vector<8x96xf32> -> vector<8x96xf32>
    %c120 = arith.constant 120 : index
    %c0_10 = arith.constant 0 : index
    %20 = vector.load %arg1[%c120, %c0_10] : memref<544x128xf32, #tpu.memory_space<vmem>>, vector<1x96xf32>
    %21 = vector.broadcast %20 : vector<1x96xf32> to vector<8x96xf32>
    %22 = arith.addf %19, %21 : vector<8x96xf32>
    %23 = vector.extract_strided_slice %22 {offsets = [0, 0], sizes = [8, 32], strides = [1, 1]} : vector<8x96xf32> to vector<8x32xf32>
    %24 = vector.extract_strided_slice %22 {offsets = [0, 32], sizes = [8, 32], strides = [1, 1]} : vector<8x96xf32> to vector<8x32xf32>
    %25 = vector.extract_strided_slice %22 {offsets = [0, 64], sizes = [8, 32], strides = [1, 1]} : vector<8x96xf32> to vector<8x32xf32>
    %c168 = arith.constant 168 : index
    %c0_11 = arith.constant 0 : index
    %26 = vector.load %arg1[%c168, %c0_11] : memref<544x128xf32, #tpu.memory_space<vmem>>, vector<32x32xf32>
    %27 = tpu.concatenate %24, %24, %24, %24 in 0 : vector<8x32xf32>, vector<8x32xf32>, vector<8x32xf32>, vector<8x32xf32> -> vector<32x32xf32>
    %28 = arith.mulf %27, %26 : vector<32x32xf32>
    %29 = tpu.concatenate %25, %25, %25, %25 in 0 : vector<8x32xf32>, vector<8x32xf32>, vector<8x32xf32>, vector<8x32xf32> -> vector<32x32xf32>
    %30 = arith.mulf %29, %26 : vector<32x32xf32>
    %cst_12 = arith.constant dense<0.000000e+00> : vector<8x32xf32>
    %31 = tpu.matmul %23, %28, %cst_12 {dimension_numbers = #tpu.dot_dimension_numbers<[1], [1], [0], [0], [0, 0, 1, 0], [], []>} : vector<8x32xf32>, vector<32x32xf32>, vector<8x32xf32> -> vector<8x32xf32>
    %c200 = arith.constant 200 : index
    %c0_13 = arith.constant 0 : index
    %32 = vector.load %arg1[%c200, %c0_13] : memref<544x128xf32, #tpu.memory_space<vmem>>, vector<8x32xf32>
    %33 = arith.addf %31, %32 : vector<8x32xf32>
    %cst_14 = arith.constant dense<0xFF800000> : vector<8xf32>
    %34 = vector.multi_reduction <maximumf>, %33, %cst_14 [1] : vector<8x32xf32> to vector<8xf32>
    %35 = vector.shape_cast %34 : vector<8xf32> to vector<8x1xf32>
    %36 = vector.broadcast %35 : vector<8x1xf32> to vector<8x32xf32>
    %37 = arith.subf %33, %36 : vector<8x32xf32>
    %38 = math.exp %37 : vector<8x32xf32>
    %c208 = arith.constant 208 : index
    %c0_15 = arith.constant 0 : index
    %39 = vector.load %arg1[%c208, %c0_15] : memref<544x128xf32, #tpu.memory_space<vmem>>, vector<32x32xf32>
    %cst_16 = arith.constant dense<0.000000e+00> : vector<8x32xf32>
    %40 = tpu.matmul %38, %39, %cst_16 {dimension_numbers = #tpu.dot_dimension_numbers<[1], [0], [0], [1], [0, 0, 1, 1], [], []>} : vector<8x32xf32>, vector<32x32xf32>, vector<8x32xf32> -> vector<8x32xf32>
    %41 = arith.divf %38, %40 : vector<8x32xf32>
    %cst_17 = arith.constant dense<0.000000e+00> : vector<8x32xf32>
    %42 = tpu.matmul %41, %30, %cst_17 {dimension_numbers = #tpu.dot_dimension_numbers<[1], [0], [0], [1], [0, 0, 1, 1], [], []>} : vector<8x32xf32>, vector<32x32xf32>, vector<8x32xf32> -> vector<8x32xf32>
    %c240 = arith.constant 240 : index
    %c0_18 = arith.constant 0 : index
    %43 = vector.load %arg1[%c240, %c0_18] : memref<544x128xf32, #tpu.memory_space<vmem>>, vector<32x8xf32>
    %cst_19 = arith.constant dense<0.000000e+00> : vector<8x8xf32>
    %44 = tpu.matmul %41, %43, %cst_19 {dimension_numbers = #tpu.dot_dimension_numbers<[1], [0], [0], [1], [0, 0, 1, 1], [], []>} : vector<8x32xf32>, vector<32x8xf32>, vector<8x8xf32> -> vector<8x8xf32>
    %c128 = arith.constant 128 : index
    %c0_20 = arith.constant 0 : index
    %45 = vector.load %arg1[%c128, %c0_20] : memref<544x128xf32, #tpu.memory_space<vmem>>, vector<32x32xf32>
    %cst_21 = arith.constant dense<0.000000e+00> : vector<8x32xf32>
    %46 = tpu.matmul %42, %45, %cst_21 {dimension_numbers = #tpu.dot_dimension_numbers<[1], [0], [0], [1], [0, 0, 1, 1], [], []>} : vector<8x32xf32>, vector<32x32xf32>, vector<8x32xf32> -> vector<8x32xf32>
    %c160 = arith.constant 160 : index
    %c0_22 = arith.constant 0 : index
    %47 = vector.load %arg1[%c160, %c0_22] : memref<544x128xf32, #tpu.memory_space<vmem>>, vector<1x32xf32>
    %48 = vector.broadcast %47 : vector<1x32xf32> to vector<8x32xf32>
    %49 = arith.addf %46, %48 : vector<8x32xf32>
    %c272 = arith.constant 272 : index
    %c0_23 = arith.constant 0 : index
    %50 = vector.load %arg1[%c272, %c0_23] : memref<544x128xf32, #tpu.memory_space<vmem>>, vector<2x8xf32>
    %cst_24 = arith.constant dense<0.000000e+00> : vector<2x32xf32>
    %51 = tpu.matmul %50, %49, %cst_24 {dimension_numbers = #tpu.dot_dimension_numbers<[1], [0], [0], [1], [0, 0, 1, 1], [], []>} : vector<2x8xf32>, vector<8x32xf32>, vector<2x32xf32> -> vector<2x32xf32>
    %c280 = arith.constant 280 : index
    %c0_25 = arith.constant 0 : index
    %52 = vector.load %arg1[%c280, %c0_25] : memref<544x128xf32, #tpu.memory_space<vmem>>, vector<32x64xf32>
    %cst_26 = arith.constant dense<0.000000e+00> : vector<2x64xf32>
    %53 = tpu.matmul %51, %52, %cst_26 {dimension_numbers = #tpu.dot_dimension_numbers<[1], [0], [0], [1], [0, 0, 1, 1], [], []>} : vector<2x32xf32>, vector<32x64xf32>, vector<2x64xf32> -> vector<2x64xf32>
    %c312 = arith.constant 312 : index
    %c0_27 = arith.constant 0 : index
    %54 = vector.load %arg1[%c312, %c0_27] : memref<544x128xf32, #tpu.memory_space<vmem>>, vector<1x64xf32>
    %55 = vector.broadcast %54 : vector<1x64xf32> to vector<2x64xf32>
    %56 = arith.addf %53, %55 : vector<2x64xf32>
    %cst_28 = arith.constant dense<0.000000e+00> : vector<2xf32>
    %57 = vector.multi_reduction <add>, %56, %cst_28 [1] : vector<2x64xf32> to vector<2xf32>
    %58 = vector.shape_cast %57 : vector<2xf32> to vector<2x1xf32>
    %cst_29 = arith.constant 6.400000e+01 : f32
    %59 = vector.broadcast %cst_29 : f32 to vector<2x1xf32>
    %60 = arith.divf %58, %59 : vector<2x1xf32>
    %61 = vector.broadcast %60 : vector<2x1xf32> to vector<2x64xf32>
    %62 = arith.subf %56, %61 : vector<2x64xf32>
    %63 = arith.mulf %62, %62 : vector<2x64xf32>
    %cst_30 = arith.constant dense<0.000000e+00> : vector<2xf32>
    %64 = vector.multi_reduction <add>, %63, %cst_30 [1] : vector<2x64xf32> to vector<2xf32>
    %65 = vector.shape_cast %64 : vector<2xf32> to vector<2x1xf32>
    %cst_31 = arith.constant 6.400000e+01 : f32
    %66 = vector.broadcast %cst_31 : f32 to vector<2x1xf32>
    %67 = arith.divf %65, %66 : vector<2x1xf32>
    %68 = vector.broadcast %60 : vector<2x1xf32> to vector<2x64xf32>
    %69 = arith.subf %56, %68 : vector<2x64xf32>
    %cst_32 = arith.constant 9.99999974E-6 : f32
    %70 = vector.broadcast %cst_32 : f32 to vector<2x1xf32>
    %71 = arith.addf %67, %70 : vector<2x1xf32>
    %72 = math.rsqrt %71 : vector<2x1xf32>
    %73 = vector.broadcast %72 : vector<2x1xf32> to vector<2x64xf32>
    %74 = arith.mulf %69, %73 : vector<2x64xf32>
    %c320 = arith.constant 320 : index
    %c0_33 = arith.constant 0 : index
    %75 = vector.load %arg1[%c320, %c0_33] : memref<544x128xf32, #tpu.memory_space<vmem>>, vector<1x64xf32>
    %76 = vector.broadcast %75 : vector<1x64xf32> to vector<2x64xf32>
    %77 = arith.mulf %74, %76 : vector<2x64xf32>
    %c328 = arith.constant 328 : index
    %c0_34 = arith.constant 0 : index
    %78 = vector.load %arg1[%c328, %c0_34] : memref<544x128xf32, #tpu.memory_space<vmem>>, vector<1x64xf32>
    %79 = vector.broadcast %78 : vector<1x64xf32> to vector<2x64xf32>
    %80 = arith.addf %77, %79 : vector<2x64xf32>
    %cst_35 = arith.constant 0.000000e+00 : f32
    %81 = vector.broadcast %cst_35 : f32 to vector<2x64xf32>
    %82 = arith.maximumf %80, %81 : vector<2x64xf32>
    %c336 = arith.constant 336 : index
    %c0_36 = arith.constant 0 : index
    %83 = vector.load %arg1[%c336, %c0_36] : memref<544x128xf32, #tpu.memory_space<vmem>>, vector<64x32xf32>
    %cst_37 = arith.constant dense<0.000000e+00> : vector<2x32xf32>
    %84 = tpu.matmul %82, %83, %cst_37 {dimension_numbers = #tpu.dot_dimension_numbers<[1], [0], [0], [1], [0, 0, 1, 1], [], []>} : vector<2x64xf32>, vector<64x32xf32>, vector<2x32xf32> -> vector<2x32xf32>
    %c400 = arith.constant 400 : index
    %c0_38 = arith.constant 0 : index
    %85 = vector.load %arg1[%c400, %c0_38] : memref<544x128xf32, #tpu.memory_space<vmem>>, vector<1x32xf32>
    %86 = vector.broadcast %85 : vector<1x32xf32> to vector<2x32xf32>
    %87 = arith.addf %84, %86 : vector<2x32xf32>
    %cst_39 = arith.constant dense<0.000000e+00> : vector<2xf32>
    %88 = vector.multi_reduction <add>, %87, %cst_39 [1] : vector<2x32xf32> to vector<2xf32>
    %89 = vector.shape_cast %88 : vector<2xf32> to vector<2x1xf32>
    %cst_40 = arith.constant 3.200000e+01 : f32
    %90 = vector.broadcast %cst_40 : f32 to vector<2x1xf32>
    %91 = arith.divf %89, %90 : vector<2x1xf32>
    %92 = vector.broadcast %91 : vector<2x1xf32> to vector<2x32xf32>
    %93 = arith.subf %87, %92 : vector<2x32xf32>
    %94 = arith.mulf %93, %93 : vector<2x32xf32>
    %cst_41 = arith.constant dense<0.000000e+00> : vector<2xf32>
    %95 = vector.multi_reduction <add>, %94, %cst_41 [1] : vector<2x32xf32> to vector<2xf32>
    %96 = vector.shape_cast %95 : vector<2xf32> to vector<2x1xf32>
    %cst_42 = arith.constant 3.200000e+01 : f32
    %97 = vector.broadcast %cst_42 : f32 to vector<2x1xf32>
    %98 = arith.divf %96, %97 : vector<2x1xf32>
    %99 = vector.broadcast %91 : vector<2x1xf32> to vector<2x32xf32>
    %100 = arith.subf %87, %99 : vector<2x32xf32>
    %cst_43 = arith.constant 9.99999974E-6 : f32
    %101 = vector.broadcast %cst_43 : f32 to vector<2x1xf32>
    %102 = arith.addf %98, %101 : vector<2x1xf32>
    %103 = math.rsqrt %102 : vector<2x1xf32>
    %104 = vector.broadcast %103 : vector<2x1xf32> to vector<2x32xf32>
    %105 = arith.mulf %100, %104 : vector<2x32xf32>
    %c408 = arith.constant 408 : index
    %c0_44 = arith.constant 0 : index
    %106 = vector.load %arg1[%c408, %c0_44] : memref<544x128xf32, #tpu.memory_space<vmem>>, vector<1x32xf32>
    %107 = vector.broadcast %106 : vector<1x32xf32> to vector<2x32xf32>
    %108 = arith.mulf %105, %107 : vector<2x32xf32>
    %c416 = arith.constant 416 : index
    %c0_45 = arith.constant 0 : index
    %109 = vector.load %arg1[%c416, %c0_45] : memref<544x128xf32, #tpu.memory_space<vmem>>, vector<1x32xf32>
    %110 = vector.broadcast %109 : vector<1x32xf32> to vector<2x32xf32>
    %111 = arith.addf %108, %110 : vector<2x32xf32>
    %c424 = arith.constant 424 : index
    %c0_46 = arith.constant 0 : index
    %112 = vector.load %arg1[%c424, %c0_46] : memref<544x128xf32, #tpu.memory_space<vmem>>, vector<32x32xf32>
    %cst_47 = arith.constant dense<0.000000e+00> : vector<2x32xf32>
    %113 = tpu.matmul %111, %112, %cst_47 {dimension_numbers = #tpu.dot_dimension_numbers<[1], [0], [0], [1], [0, 0, 1, 1], [], []>} : vector<2x32xf32>, vector<32x32xf32>, vector<2x32xf32> -> vector<2x32xf32>
    %c456 = arith.constant 456 : index
    %c0_48 = arith.constant 0 : index
    %114 = vector.load %arg1[%c456, %c0_48] : memref<544x128xf32, #tpu.memory_space<vmem>>, vector<1x32xf32>
    %115 = vector.broadcast %114 : vector<1x32xf32> to vector<2x32xf32>
    %116 = arith.addf %113, %115 : vector<2x32xf32>
    %cst_49 = arith.constant dense<0.000000e+00> : vector<2xf32>
    %117 = vector.multi_reduction <add>, %116, %cst_49 [1] : vector<2x32xf32> to vector<2xf32>
    %118 = vector.shape_cast %117 : vector<2xf32> to vector<2x1xf32>
    %cst_50 = arith.constant 3.200000e+01 : f32
    %119 = vector.broadcast %cst_50 : f32 to vector<2x1xf32>
    %120 = arith.divf %118, %119 : vector<2x1xf32>
    %121 = vector.broadcast %120 : vector<2x1xf32> to vector<2x32xf32>
    %122 = arith.subf %116, %121 : vector<2x32xf32>
    %123 = arith.mulf %122, %122 : vector<2x32xf32>
    %cst_51 = arith.constant dense<0.000000e+00> : vector<2xf32>
    %124 = vector.multi_reduction <add>, %123, %cst_51 [1] : vector<2x32xf32> to vector<2xf32>
    %125 = vector.shape_cast %124 : vector<2xf32> to vector<2x1xf32>
    %cst_52 = arith.constant 3.200000e+01 : f32
    %126 = vector.broadcast %cst_52 : f32 to vector<2x1xf32>
    %127 = arith.divf %125, %126 : vector<2x1xf32>
    %128 = vector.broadcast %120 : vector<2x1xf32> to vector<2x32xf32>
    %129 = arith.subf %116, %128 : vector<2x32xf32>
    %cst_53 = arith.constant 9.99999974E-6 : f32
    %130 = vector.broadcast %cst_53 : f32 to vector<2x1xf32>
    %131 = arith.addf %127, %130 : vector<2x1xf32>
    %132 = math.rsqrt %131 : vector<2x1xf32>
    %133 = vector.broadcast %132 : vector<2x1xf32> to vector<2x32xf32>
    %134 = arith.mulf %129, %133 : vector<2x32xf32>
    %c464 = arith.constant 464 : index
    %c0_54 = arith.constant 0 : index
    %135 = vector.load %arg1[%c464, %c0_54] : memref<544x128xf32, #tpu.memory_space<vmem>>, vector<1x32xf32>
    %136 = vector.broadcast %135 : vector<1x32xf32> to vector<2x32xf32>
    %137 = arith.mulf %134, %136 : vector<2x32xf32>
    %c472 = arith.constant 472 : index
    %c0_55 = arith.constant 0 : index
    %138 = vector.load %arg1[%c472, %c0_55] : memref<544x128xf32, #tpu.memory_space<vmem>>, vector<1x32xf32>
    %139 = vector.broadcast %138 : vector<1x32xf32> to vector<2x32xf32>
    %140 = arith.addf %137, %139 : vector<2x32xf32>
    %cst_56 = arith.constant 0.000000e+00 : f32
    %141 = vector.broadcast %cst_56 : f32 to vector<2x32xf32>
    %142 = arith.maximumf %140, %141 : vector<2x32xf32>
    %c480 = arith.constant 480 : index
    %c0_57 = arith.constant 0 : index
    %143 = vector.load %arg1[%c480, %c0_57] : memref<544x128xf32, #tpu.memory_space<vmem>>, vector<32x16xf32>
    %cst_58 = arith.constant dense<0.000000e+00> : vector<2x16xf32>
    %144 = tpu.matmul %142, %143, %cst_58 {dimension_numbers = #tpu.dot_dimension_numbers<[1], [0], [0], [1], [0, 0, 1, 1], [], []>} : vector<2x32xf32>, vector<32x16xf32>, vector<2x16xf32> -> vector<2x16xf32>
    %c512 = arith.constant 512 : index
    %c0_59 = arith.constant 0 : index
    %145 = vector.load %arg1[%c512, %c0_59] : memref<544x128xf32, #tpu.memory_space<vmem>>, vector<1x16xf32>
    %146 = vector.broadcast %145 : vector<1x16xf32> to vector<2x16xf32>
    %147 = arith.addf %144, %146 : vector<2x16xf32>
    %cst_60 = arith.constant 0.000000e+00 : f32
    %148 = vector.broadcast %cst_60 : f32 to vector<2x16xf32>
    %149 = arith.maximumf %147, %148 : vector<2x16xf32>
    %c520 = arith.constant 520 : index
    %c0_61 = arith.constant 0 : index
    %150 = vector.load %arg1[%c520, %c0_61] : memref<544x128xf32, #tpu.memory_space<vmem>>, vector<16x1xf32>
    %cst_62 = arith.constant dense<0.000000e+00> : vector<2x1xf32>
    %151 = tpu.matmul %149, %150, %cst_62 {dimension_numbers = #tpu.dot_dimension_numbers<[1], [0], [0], [1], [0, 0, 1, 1], [], []>} : vector<2x16xf32>, vector<16x1xf32>, vector<2x1xf32> -> vector<2x1xf32>
    %c536 = arith.constant 536 : index
    %c0_63 = arith.constant 0 : index
    %152 = vector.load %arg1[%c536, %c0_63] : memref<544x128xf32, #tpu.memory_space<vmem>>, vector<1x1xf32>
    %153 = vector.broadcast %152 : vector<1x1xf32> to vector<2x1xf32>
    %154 = arith.addf %151, %153 : vector<2x1xf32>
    %155 = arith.negf %154 : vector<2x1xf32>
    %156 = math.exp %155 : vector<2x1xf32>
    %cst_64 = arith.constant 1.000000e+00 : f32
    %157 = vector.broadcast %cst_64 : f32 to vector<2x1xf32>
    %158 = arith.addf %157, %156 : vector<2x1xf32>
    %159 = arith.divf %157, %158 : vector<2x1xf32>
    %cst_65 = arith.constant 0.000000e+00 : f32
    %160 = vector.broadcast %cst_65 : f32 to vector<8x128xf32>
    %c0_66 = arith.constant 0 : index
    %c0_67 = arith.constant 0 : index
    %161 = vector.load %arg2[%c0_66, %c0_67] : memref<8x128xf32, #tpu.memory_space<vmem>>, vector<8x128xf32>
    tpu.vector_store %arg2[%c0_66, %c0_67], %160 {strides = array<i32>} : memref<8x128xf32, #tpu.memory_space<vmem>>, vector<8x128xf32>,
    %c0_68 = arith.constant 0 : index
    %c0_69 = arith.constant 0 : index
    %162 = vector.load %arg2[%c0_68, %c0_69] : memref<8x128xf32, #tpu.memory_space<vmem>>, vector<8x8xf32>
    tpu.vector_store %arg2[%c0_68, %c0_69], %44 {strides = array<i32>} : memref<8x128xf32, #tpu.memory_space<vmem>>, vector<8x8xf32>,
    %c0_70 = arith.constant 0 : index
    %c32 = arith.constant 32 : index
    %163 = vector.load %arg2[%c0_70, %c32] : memref<8x128xf32, #tpu.memory_space<vmem>>, vector<2x32xf32>
    tpu.vector_store %arg2[%c0_70, %c32], %111 {strides = array<i32>} : memref<8x128xf32, #tpu.memory_space<vmem>>, vector<2x32xf32>,
    %c0_71 = arith.constant 0 : index
    %c64_72 = arith.constant 64 : index
    %164 = vector.load %arg2[%c0_71, %c64_72] : memref<8x128xf32, #tpu.memory_space<vmem>>, vector<2x1xf32>
    tpu.vector_store %arg2[%c0_71, %c64_72], %159 {strides = array<i32>} : memref<8x128xf32, #tpu.memory_space<vmem>>, vector<2x1xf32>,
    return
  }
}

</mosaic_0001>

<llo_original>
// kernel: forward.1
$region0: #{forward.1}
  #allocation0 [shape = 'u32[]', space=smem, size = 0x4, offset = 0x4, fixed_abs, tag = 'smem constant byte address 0x4 - core index']
  #allocation1 [shape = 'u32[144,128]{1,0:T(1,128)}', space=vmem, size = 0x12000, scoped, tag = 'internal scratch']
  %s0 = inlined_call_operand.vmem [shape: f32[8,64], index: 0, kind: input, shape index: {}]
  %s1 = inlined_call_operand.hbm [shape: f32[544,128], index: 1, kind: input, shape index: {}]
  %s2 = inlined_call_operand.vmem [shape: f32[8,128], index: 2, kind: output, shape index: {}]
  %s3 = sld [smem:[#allocation0]]
  $region22: #{forward.1} parent=0
    _
  %s5 = ssub.s32 1, %s3
  %s6 = scalar_select 0, %s5, %s3
  $region1: #{forward.1} parent=0
    #allocation2 [shape = 'u8[278528]{0}', space=vmem, size = 0x44000, scoped, tag = 'input window, operand 1, single buffered']
    #allocation3 [shape = 's32[1]{0}', space=sflag, size = 0x4, scoped, tag = 'scoped memory for forward.1']
    %7 = vsyncpa [#allocation3], 0
    // Predicated region
    $region2: #{forward.1} parent=1 // pred_check
      _
    $region3: #{forward.1} parent=1 // pred_check_branch
      %9 = sbr.rel (0) target = $region5
    $region4: #{forward.1} parent=1 // pred_region
      _
    $region5: #{forward.1} parent=1 // pred_fallthru
      _
    // Predicated region
    $region6: #{forward.1} parent=1 // pred_check
      _
    $region7: #{forward.1} parent=1 // pred_check_branch
      %11 = sbr.rel (0) target = $region9
    $region8: #{forward.1} parent=1 // pred_region
      %s13 = ssub.s32 8704, 8704
      %14 = vsyncadd [#allocation3], %s13
      %s15 = sshll.u32 [#allocation2], 4
      %s16 = int_to_ptr.vmem [resolvable:$true] %s15
      %21 = dma.hbm_to_vmem [thread:$0]  %s1, 8704, %s16, [#allocation3], 128, 128, 8
    $region9: #{forward.1} parent=1 // pred_fallthru
      _
    // Predicated region
    $region10: #{forward.1} parent=1 // pred_check
      _
    $region11: #{forward.1} parent=1 // pred_check_branch
      %23 = sbr.rel (0) target = $region13
    $region12: #{forward.1} parent=1 // pred_region
      %24 = dma.done [#allocation3], 8704
    $region13: #{forward.1} parent=1 // pred_fallthru
      _
    %v25 = vld [vmem:[%s0] sm:$0xff]
    %v26 = vld [vmem:[#allocation2] sm:$0xff]
    %v27 = vld [vmem:[#allocation2 + $0x8] sm:$0xff]
    %v28 = vld [vmem:[#allocation2 + $0x10] sm:$0xff]
    %v29 = vld [vmem:[#allocation2 + $0x18] sm:$0xff]
    %v30 = vld [vmem:[#allocation2 + $0x20] sm:$0xff]
    %v31 = vld [vmem:[#allocation2 + $0x28] sm:$0xff]
    %v32 = vld [vmem:[#allocation2 + $0x30] sm:$0xff]
    %v33 = vld [vmem:[#allocation2 + $0x38] sm:$0xff]
    %v34 = vld [vmem:[#allocation2 + $0x40] sm:$0xff]
    %vm35 = vcmask 523264
    %v37 = vsel %vm35, %v25, 0
    %39 = vmatprep.subr.mxu0 0.0
    %40 = vmatpush1.msra.mxu0 0.0
    %41 = vmatprep.subr.mxu0 0.0
    %42 = vmatpush1.msra.mxu0 0.0
    %43 = vmatprep.subr.mxu0 0.0
    %44 = vmatpush1.msra.mxu0 0.0
    %45 = vmatprep.subr.mxu0 0.0
    %46 = vmatpush1.msra.mxu0 0.0
    %47 = vmatprep.subr.mxu0 0.0
    %48 = vmatpush1.msra.mxu0 0.0
    %49 = vmatprep.subr.mxu0 0.0
    %50 = vmatpush1.msra.mxu0 0.0
    %51 = vmatprep.subr.mxu0 0.0
    %52 = vmatpush1.msra.mxu0 0.0
    %53 = vmatprep.subr.mxu0 0.0
    %54 = vmatpush1.msra.mxu0 0.0
    %55 = vmatprep.subr.mxu0 0.0
    %56 = vmatpush1.msra.mxu0 %v33
    %57 = vmatprep.subr.mxu0 0.0
    %58 = vmatpush1.msra.mxu0 %v32
    %59 = vmatprep.subr.mxu0 0.0
    %60 = vmatpush1.msra.mxu0 %v31
    %61 = vmatprep.subr.mxu0 0.0
    %62 = vmatpush1.msra.mxu0 %v30
    %63 = vmatprep.subr.mxu0 0.0
    %64 = vmatpush1.msra.mxu0 %v29
    %65 = vmatprep.subr.mxu0 0.0
    %66 = vmatpush1.msra.mxu0 %v28
    %67 = vmatprep.subr.mxu0 0.0
    %68 = vmatpush1.msra.mxu0 %v27
    %69 = vmatprep.subr.mxu0 0.0
    %70 = vmatpush1.msra.mxu0 %v26
    %71 = vmatprep.subr.mxu0 0.0
    %72 = vmatpush2.msra.mxu0 0.0
    %73 = vmatprep.subr.mxu0 0.0
    %74 = vmatpush2.msra.mxu0 0.0
    %75 = vmatprep.subr.mxu0 0.0
    %76 = vmatpush2.msra.mxu0 0.0
    %77 = vmatprep.subr.mxu0 0.0
    %78 = vmatpush2.msra.mxu0 0.0
    %79 = vmatprep.subr.mxu0 0.0
    %80 = vmatpush2.msra.mxu0 0.0
    %81 = vmatprep.subr.mxu0 0.0
    %82 = vmatpush2.msra.mxu0 0.0
    %83 = vmatprep.subr.mxu0 0.0
    %84 = vmatpush2.msra.mxu0 0.0
    %85 = vmatprep.subr.mxu0 0.0
    %86 = vmatpush2.msra.mxu0 0.0
    %87 = vmatprep.subr.mxu0 0.0
    %88 = vmatpush2.msra.mxu0 0.0
    %89 = vmatprep.subr.mxu0 0.0
    %90 = vmatpush2.msra.mxu0 0.0
    %91 = vmatprep.subr.mxu0 0.0
    %92 = vmatpush2.msra.mxu0 0.0
    %93 = vmatprep.subr.mxu0 0.0
    %94 = vmatpush2.msra.mxu0 0.0
    %95 = vmatprep.subr.mxu0 0.0
    %96 = vmatpush2.msra.mxu0 0.0
    %97 = vmatprep.subr.mxu0 0.0
    %98 = vmatpush2.msra.mxu0 0.0
    %99 = vmatprep.subr.mxu0 0.0
    %100 = vmatpush2.msra.mxu0 0.0
    %101 = vmatprep.subr.mxu0 0.0
    %102 = vmatpush2.msra.mxu0 0.0
    %103 = vmatprep.mubr.f32.mxu0 0.0
    %104 = vmatmul.mubr.f32.gmra.mxu0 %v37
    %v105 = vpop.f32.mrf.mxu0
    %v106 = vadd.f32 %v34, %v105
    %v107 = vpop.f32.mrf.mxu0
    %108 = vdwg.mxu0
    %v109 = vld [vmem:[#allocation2 + $0x48] sm:$0xff]
    %v110 = vld [vmem:[#allocation2 + $0x50] sm:$0x1]
    %v111 = vlaneseq
    %v112 = vshrl.u32 %v111, 7
    %v113 = vsub.s32 0, %v112
    %v114 = vrot.slane %v110, %v113
    %v115 = vmul.f32 %v109, %v114
    %vm116 = vcmask 31744
    %v117 = vsel %vm116, %v115, 0.0
    %118 = vadd.xlane.f32.xlu0 %v117
    %v119 = vpop.xlane.xlu0 %118
    %v120 = vxor.u32 %v119, 2147483648
    %v121 = vmul.f32 %v120, 1.442695
    %v122 = vpow.pop %v121
    %v123 = vadd.f32 %v122, 1.0
    %v124 = vrcp.pop %v123
    %v125 = vmul.f32 1.0, %v124
    %v126 = vmul.f32 %v106, %v125
    %v127 = vld [vmem:[#allocation2 + $0x58] sm:$0xff]
    %v128 = vld [vmem:[#allocation2 + $0x60] sm:$0xff]
    %v129 = vld [vmem:[#allocation2 + $0x68] sm:$0xff]
    %v130 = vld [vmem:[#allocation2 + $0x70] sm:$0xff]
    %v131 = vld [vmem:[#allocation2 + $0x78] sm:$0x1]
    %v132 = vlaneseq
    %v133 = vshrl.u32 %v132, 7
    %v134 = vsub.s32 0, %v133
    %v135 = vrot.slane %v131, %v134
    %vm136 = vcmask 261120
    %v138 = vsel %vm136, %v126, 0
    %140 = vmatprep.subr.mxu0 0.0
    %141 = vmatpush1.msra.mxu0 0.0
    %142 = vmatprep.subr.mxu0 0.0
    %143 = vmatpush1.msra.mxu0 0.0
    %144 = vmatprep.subr.mxu0 0.0
    %145 = vmatpush1.msra.mxu0 0.0
    %146 = vmatprep.subr.mxu0 0.0
    %147 = vmatpush1.msra.mxu0 0.0
    %148 = vmatprep.subr.mxu0 0.0
    %149 = vmatpush1.msra.mxu0 0.0
    %150 = vmatprep.subr.mxu0 0.0
    %151 = vmatpush1.msra.mxu0 0.0
    %152 = vmatprep.subr.mxu0 0.0
    %153 = vmatpush1.msra.mxu0 0.0
    %154 = vmatprep.subr.mxu0 0.0
    %155 = vmatpush1.msra.mxu0 0.0
    %156 = vmatprep.subr.mxu0 0.0
    %157 = vmatpush1.msra.mxu0 0.0
    %158 = vmatprep.subr.mxu0 0.0
    %159 = vmatpush1.msra.mxu0 0.0
    %160 = vmatprep.subr.mxu0 0.0
    %161 = vmatpush1.msra.mxu0 0.0
    %162 = vmatprep.subr.mxu0 0.0
    %163 = vmatpush1.msra.mxu0 0.0
    %164 = vmatprep.subr.mxu0 0.0
    %165 = vmatpush1.msra.mxu0 %v130
    %166 = vmatprep.subr.mxu0 0.0
    %167 = vmatpush1.msra.mxu0 %v129
    %168 = vmatprep.subr.mxu0 0.0
    %169 = vmatpush1.msra.mxu0 %v128
    %170 = vmatprep.subr.mxu0 0.0
    %171 = vmatpush1.msra.mxu0 %v127
    %172 = vmatprep.subr.mxu0 0.0
    %173 = vmatpush2.msra.mxu0 0.0
    %174 = vmatprep.subr.mxu0 0.0
    %175 = vmatpush2.msra.mxu0 0.0
    %176 = vmatprep.subr.mxu0 0.0
    %177 = vmatpush2.msra.mxu0 0.0
    %178 = vmatprep.subr.mxu0 0.0
    %179 = vmatpush2.msra.mxu0 0.0
    %180 = vmatprep.subr.mxu0 0.0
    %181 = vmatpush2.msra.mxu0 0.0
    %182 = vmatprep.subr.mxu0 0.0
    %183 = vmatpush2.msra.mxu0 0.0
    %184 = vmatprep.subr.mxu0 0.0
    %185 = vmatpush2.msra.mxu0 0.0
    %186 = vmatprep.subr.mxu0 0.0
    %187 = vmatpush2.msra.mxu0 0.0
    %188 = vmatprep.subr.mxu0 0.0
    %189 = vmatpush2.msra.mxu0 0.0
    %190 = vmatprep.subr.mxu0 0.0
    %191 = vmatpush2.msra.mxu0 0.0
    %192 = vmatprep.subr.mxu0 0.0
    %193 = vmatpush2.msra.mxu0 0.0
    %194 = vmatprep.subr.mxu0 0.0
    %195 = vmatpush2.msra.mxu0 0.0
    %196 = vmatprep.subr.mxu0 0.0
    %197 = vmatpush2.msra.mxu0 0.0
    %198 = vmatprep.subr.mxu0 0.0
    %199 = vmatpush2.msra.mxu0 0.0
    %200 = vmatprep.subr.mxu0 0.0
    %201 = vmatpush2.msra.mxu0 0.0
    %202 = vmatprep.subr.mxu0 0.0
    %203 = vmatpush2.msra.mxu0 0.0
    %204 = vmatprep.mubr.f32.mxu0 0.0
    %205 = vmatmul.mubr.f32.gmra.mxu0 %v138
    %v206 = vpop.f32.mrf.mxu0
    %v207 = vadd.f32 %v135, %v206
    %v208 = vpop.f32.mrf.mxu0
    %209 = vdwg.mxu0
    %v210 = vld [vmem:[#allocation2 + $0xa8] sm:$0xff]
    %v211 = vld [vmem:[#allocation2 + $0xb0] sm:$0xff]
    %v212 = vld [vmem:[#allocation2 + $0xb8] sm:$0xff]
    %v213 = vld [vmem:[#allocation2 + $0xc0] sm:$0xff]
    %218 = vrot.lane.b32.xlu0 %v210, 32
    %v219 = vpop.permute.xlu0 %218
    %220 = vrot.lane.b32.xlu0 %v211, 32
    %v221 = vpop.permute.xlu0 %220
    %222 = vrot.lane.b32.xlu0 %v212, 32
    %v223 = vpop.permute.xlu0 %222
    %224 = vrot.lane.b32.xlu0 %v213, 32
    %v225 = vpop.permute.xlu0 %224
    %v230 = vmul.f32 %v207, %v219
    %v231 = vmul.f32 %v207, %v221
    %v232 = vmul.f32 %v207, %v223
    %v233 = vmul.f32 %v207, %v225
    %234 = vrot.lane.b32.xlu0 %v210, 64
    %v235 = vpop.permute.xlu0 %234
    %236 = vrot.lane.b32.xlu0 %v211, 64
    %v237 = vpop.permute.xlu0 %236
    %238 = vrot.lane.b32.xlu0 %v212, 64
    %v239 = vpop.permute.xlu0 %238
    %240 = vrot.lane.b32.xlu0 %v213, 64
    %v241 = vpop.permute.xlu0 %240
    %v246 = vmul.f32 %v207, %v235
    %v247 = vmul.f32 %v207, %v237
    %v248 = vmul.f32 %v207, %v239
    %v249 = vmul.f32 %v207, %v241
    %v250 = vld [vmem:[#allocation2 + $0xc8] sm:$0xff]
    %255 = vrot.lane.b32.xlu0 %v230, 96
    %v256 = vpop.permute.xlu0 %255
    %257 = vrot.lane.b32.xlu0 %v231, 96
    %v258 = vpop.permute.xlu0 %257
    %259 = vrot.lane.b32.xlu0 %v232, 96
    %v260 = vpop.permute.xlu0 %259
    %261 = vrot.lane.b32.xlu0 %v233, 96
    %v262 = vpop.permute.xlu0 %261
    %v264 = vsel %vm136, %v207, 0
    %v266 = vsel %vm136, %v256, 0
    %v268 = vsel %vm136, %v258, 0
    %v270 = vsel %vm136, %v260, 0
    %v272 = vsel %vm136, %v262, 0
    %274 = vmatprep.subr.mxu0 0.0
    %275 = vmatpush1.xpose.msra.mxu0 0.0
    %276 = vmatprep.subr.mxu0 0.0
    %277 = vmatpush1.xpose.msra.mxu0 0.0
    %278 = vmatprep.subr.mxu0 0.0
    %279 = vmatpush1.xpose.msra.mxu0 0.0
    %280 = vmatprep.subr.mxu0 0.0
    %281 = vmatpush1.xpose.msra.mxu0 0.0
    %282 = vmatprep.subr.mxu0 0.0
    %283 = vmatpush1.xpose.msra.mxu0 0.0
    %284 = vmatprep.subr.mxu0 0.0
    %285 = vmatpush1.xpose.msra.mxu0 0.0
    %286 = vmatprep.subr.mxu0 0.0
    %287 = vmatpush1.xpose.msra.mxu0 0.0
    %288 = vmatprep.subr.mxu0 0.0
    %289 = vmatpush1.xpose.msra.mxu0 0.0
    %290 = vmatprep.subr.mxu0 0.0
    %291 = vmatpush1.xpose.msra.mxu0 0.0
    %292 = vmatprep.subr.mxu0 0.0
    %293 = vmatpush1.xpose.msra.mxu0 0.0
    %294 = vmatprep.subr.mxu0 0.0
    %295 = vmatpush1.xpose.msra.mxu0 0.0
    %296 = vmatprep.subr.mxu0 0.0
    %297 = vmatpush1.xpose.msra.mxu0 0.0
    %298 = vmatprep.subr.mxu0 0.0
    %299 = vmatpush1.xpose.msra.mxu0 %v272
    %300 = vmatprep.subr.mxu0 0.0
    %301 = vmatpush1.xpose.msra.mxu0 %v270
    %302 = vmatprep.subr.mxu0 0.0
    %303 = vmatpush1.xpose.msra.mxu0 %v268
    %304 = vmatprep.subr.mxu0 0.0
    %305 = vmatpush1.xpose.msra.mxu0 %v266
    %306 = vmatprep.subr.mxu0 0.0
    %307 = vmatpush2.xpose.msra.mxu0 0.0
    %308 = vmatprep.subr.mxu0 0.0
    %309 = vmatpush2.xpose.msra.mxu0 0.0
    %310 = vmatprep.subr.mxu0 0.0
    %311 = vmatpush2.xpose.msra.mxu0 0.0
    %312 = vmatprep.subr.mxu0 0.0
    %313 = vmatpush2.xpose.msra.mxu0 0.0
    %314 = vmatprep.subr.mxu0 0.0
    %315 = vmatpush2.xpose.msra.mxu0 0.0
    %316 = vmatprep.subr.mxu0 0.0
    %317 = vmatpush2.xpose.msra.mxu0 0.0
    %318 = vmatprep.subr.mxu0 0.0
    %319 = vmatpush2.xpose.msra.mxu0 0.0
    %320 = vmatprep.subr.mxu0 0.0
    %321 = vmatpush2.xpose.msra.mxu0 0.0
    %322 = vmatprep.subr.mxu0 0.0
    %323 = vmatpush2.xpose.msra.mxu0 0.0
    %324 = vmatprep.subr.mxu0 0.0
    %325 = vmatpush2.xpose.msra.mxu0 0.0
    %326 = vmatprep.subr.mxu0 0.0
    %327 = vmatpush2.xpose.msra.mxu0 0.0
    %328 = vmatprep.subr.mxu0 0.0
    %329 = vmatpush2.xpose.msra.mxu0 0.0
    %330 = vmatprep.subr.mxu0 0.0
    %331 = vmatpush2.xpose.msra.mxu0 0.0
    %332 = vmatprep.subr.mxu0 0.0
    %333 = vmatpush2.xpose.msra.mxu0 0.0
    %334 = vmatprep.subr.mxu0 0.0
    %335 = vmatpush2.xpose.msra.mxu0 0.0
    %336 = vmatprep.subr.mxu0 0.0
    %337 = vmatpush2.xpose.msra.mxu0 0.0
    %338 = vmatprep.mubr.f32.mxu0 0.0
    %339 = vmatmul.mubr.f32.gmra.mxu0 %v264
    %v340 = vpop.f32.mrf.mxu0
    %v341 = vadd.f32 %v250, %v340
    %v342 = vpop.f32.mrf.mxu0
    %343 = vdwg.mxu0
    %v344 = vsel %vm136, %v341, -inf
    %345 = vmax.xlane.f32.xlu0 %v344
    %v346 = vpop.xlane.xlu0 %345
    %v347 = vsub.f32 %v341, %v346
    %v348 = vmul.f32 %v347, 1.442695
    %v349 = vpow.pop %v348
    %v350 = vld [vmem:[#allocation2 + $0xd0] sm:$0xff]
    %v351 = vld [vmem:[#allocation2 + $0xd8] sm:$0xff]
    %v352 = vld [vmem:[#allocation2 + $0xe0] sm:$0xff]
    %v353 = vld [vmem:[#allocation2 + $0xe8] sm:$0xff]
    %v355 = vsel %vm136, %v349, 0
    %357 = vmatprep.subr.mxu0 0.0
    %358 = vmatpush1.msra.mxu0 0.0
    %359 = vmatprep.subr.mxu0 0.0
    %360 = vmatpush1.msra.mxu0 0.0
    %361 = vmatprep.subr.mxu0 0.0
    %362 = vmatpush1.msra.mxu0 0.0
    %363 = vmatprep.subr.mxu0 0.0
    %364 = vmatpush1.msra.mxu0 0.0
    %365 = vmatprep.subr.mxu0 0.0
    %366 = vmatpush1.msra.mxu0 0.0
    %367 = vmatprep.subr.mxu0 0.0
    %368 = vmatpush1.msra.mxu0 0.0
    %369 = vmatprep.subr.mxu0 0.0
    %370 = vmatpush1.msra.mxu0 0.0
    %371 = vmatprep.subr.mxu0 0.0
    %372 = vmatpush1.msra.mxu0 0.0
    %373 = vmatprep.subr.mxu0 0.0
    %374 = vmatpush1.msra.mxu0 0.0
    %375 = vmatprep.subr.mxu0 0.0
    %376 = vmatpush1.msra.mxu0 0.0
    %377 = vmatprep.subr.mxu0 0.0
    %378 = vmatpush1.msra.mxu0 0.0
    %379 = vmatprep.subr.mxu0 0.0
    %380 = vmatpush1.msra.mxu0 0.0
    %381 = vmatprep.subr.mxu0 0.0
    %382 = vmatpush1.msra.mxu0 %v353
    %383 = vmatprep.subr.mxu0 0.0
    %384 = vmatpush1.msra.mxu0 %v352
    %385 = vmatprep.subr.mxu0 0.0
    %386 = vmatpush1.msra.mxu0 %v351
    %387 = vmatprep.subr.mxu0 0.0
    %388 = vmatpush1.msra.mxu0 %v350
    %389 = vmatprep.subr.mxu0 0.0
    %390 = vmatpush2.msra.mxu0 0.0
    %391 = vmatprep.subr.mxu0 0.0
    %392 = vmatpush2.msra.mxu0 0.0
    %393 = vmatprep.subr.mxu0 0.0
    %394 = vmatpush2.msra.mxu0 0.0
    %395 = vmatprep.subr.mxu0 0.0
    %396 = vmatpush2.msra.mxu0 0.0
    %397 = vmatprep.subr.mxu0 0.0
    %398 = vmatpush2.msra.mxu0 0.0
    %399 = vmatprep.subr.mxu0 0.0
    %400 = vmatpush2.msra.mxu0 0.0
    %401 = vmatprep.subr.mxu0 0.0
    %402 = vmatpush2.msra.mxu0 0.0
    %403 = vmatprep.subr.mxu0 0.0
    %404 = vmatpush2.msra.mxu0 0.0
    %405 = vmatprep.subr.mxu0 0.0
    %406 = vmatpush2.msra.mxu0 0.0
    %407 = vmatprep.subr.mxu0 0.0
    %408 = vmatpush2.msra.mxu0 0.0
    %409 = vmatprep.subr.mxu0 0.0
    %410 = vmatpush2.msra.mxu0 0.0
    %411 = vmatprep.subr.mxu0 0.0
    %412 = vmatpush2.msra.mxu0 0.0
    %413 = vmatprep.subr.mxu0 0.0
    %414 = vmatpush2.msra.mxu0 0.0
    %415 = vmatprep.subr.mxu0 0.0
    %416 = vmatpush2.msra.mxu0 0.0
    %417 = vmatprep.subr.mxu0 0.0
    %418 = vmatpush2.msra.mxu0 0.0
    %419 = vmatprep.subr.mxu0 0.0
    %420 = vmatpush2.msra.mxu0 0.0
    %421 = vmatprep.mubr.f32.mxu0 0.0
    %422 = vmatmul.mubr.f32.gmra.mxu0 %v355
    %v423 = vpop.f32.mrf.mxu0
    %v424 = vadd.f32 0.0, %v423
    %v425 = vpop.f32.mrf.mxu0
    %426 = vdwg.mxu0
    %v427 = vrcp.pop %v424
    %v428 = vmul.f32 %v349, %v427
    %433 = vrot.lane.b32.xlu0 %v246, 64
    %v434 = vpop.permute.xlu0 %433
    %435 = vrot.lane.b32.xlu0 %v247, 64
    %v436 = vpop.permute.xlu0 %435
    %437 = vrot.lane.b32.xlu0 %v248, 64
    %v438 = vpop.permute.xlu0 %437
    %439 = vrot.lane.b32.xlu0 %v249, 64
    %v440 = vpop.permute.xlu0 %439
    %v446 = vsel %vm136, %v428, 0
    %448 = vmatprep.subr.mxu0 0.0
    %449 = vmatpush1.msra.mxu0 0.0
    %450 = vmatprep.subr.mxu0 0.0
    %451 = vmatpush1.msra.mxu0 0.0
    %452 = vmatprep.subr.mxu0 0.0
    %453 = vmatpush1.msra.mxu0 0.0
    %454 = vmatprep.subr.mxu0 0.0
    %455 = vmatpush1.msra.mxu0 0.0
    %456 = vmatprep.subr.mxu0 0.0
    %457 = vmatpush1.msra.mxu0 0.0
    %458 = vmatprep.subr.mxu0 0.0
    %459 = vmatpush1.msra.mxu0 0.0
    %460 = vmatprep.subr.mxu0 0.0
    %461 = vmatpush1.msra.mxu0 0.0
    %462 = vmatprep.subr.mxu0 0.0
    %463 = vmatpush1.msra.mxu0 0.0
    %464 = vmatprep.subr.mxu0 0.0
    %465 = vmatpush1.msra.mxu0 0.0
    %466 = vmatprep.subr.mxu0 0.0
    %467 = vmatpush1.msra.mxu0 0.0
    %468 = vmatprep.subr.mxu0 0.0
    %469 = vmatpush1.msra.mxu0 0.0
    %470 = vmatprep.subr.mxu0 0.0
    %471 = vmatpush1.msra.mxu0 0.0
    %472 = vmatprep.subr.mxu0 0.0
    %473 = vmatpush1.msra.mxu0 %v440
    %474 = vmatprep.subr.mxu0 0.0
    %475 = vmatpush1.msra.mxu0 %v438
    %476 = vmatprep.subr.mxu0 0.0
    %477 = vmatpush1.msra.mxu0 %v436
    %478 = vmatprep.subr.mxu0 0.0
    %479 = vmatpush1.msra.mxu0 %v434
    %480 = vmatprep.subr.mxu0 0.0
    %481 = vmatpush2.msra.mxu0 0.0
    %482 = vmatprep.subr.mxu0 0.0
    %483 = vmatpush2.msra.mxu0 0.0
    %484 = vmatprep.subr.mxu0 0.0
    %485 = vmatpush2.msra.mxu0 0.0
    %486 = vmatprep.subr.mxu0 0.0
    %487 = vmatpush2.msra.mxu0 0.0
    %488 = vmatprep.subr.mxu0 0.0
    %489 = vmatpush2.msra.mxu0 0.0
    %490 = vmatprep.subr.mxu0 0.0
    %491 = vmatpush2.msra.mxu0 0.0
    %492 = vmatprep.subr.mxu0 0.0
    %493 = vmatpush2.msra.mxu0 0.0
    %494 = vmatprep.subr.mxu0 0.0
    %495 = vmatpush2.msra.mxu0 0.0
    %496 = vmatprep.subr.mxu0 0.0
    %497 = vmatpush2.msra.mxu0 0.0
    %498 = vmatprep.subr.mxu0 0.0
    %499 = vmatpush2.msra.mxu0 0.0
    %500 = vmatprep.subr.mxu0 0.0
    %501 = vmatpush2.msra.mxu0 0.0
    %502 = vmatprep.subr.mxu0 0.0
    %503 = vmatpush2.msra.mxu0 0.0
    %504 = vmatprep.subr.mxu0 0.0
    %505 = vmatpush2.msra.mxu0 0.0
    %506 = vmatprep.subr.mxu0 0.0
    %507 = vmatpush2.msra.mxu0 0.0
    %508 = vmatprep.subr.mxu0 0.0
    %509 = vmatpush2.msra.mxu0 0.0
    %510 = vmatprep.subr.mxu0 0.0
    %511 = vmatpush2.msra.mxu0 0.0
    %512 = vmatprep.mubr.f32.mxu0 0.0
    %513 = vmatmul.mubr.f32.gmra.mxu0 %v446
    %v514 = vpop.f32.mrf.mxu0
    %v515 = vadd.f32 0.0, %v514
    %v516 = vpop.f32.mrf.mxu0
    %517 = vdwg.mxu0
    %v518 = vld [vmem:[#allocation2 + $0xf0] sm:$0xff]
    %v519 = vld [vmem:[#allocation2 + $0xf8] sm:$0xff]
    %v520 = vld [vmem:[#allocation2 + $0x100] sm:$0xff]
    %v521 = vld [vmem:[#allocation2 + $0x108] sm:$0xff]
    %522 = vmatprep.subr.mxu0 0.0
    %523 = vmatpush1.msra.mxu0 0.0
    %524 = vmatprep.subr.mxu0 0.0
    %525 = vmatpush1.msra.mxu0 0.0
    %526 = vmatprep.subr.mxu0 0.0
    %527 = vmatpush1.msra.mxu0 0.0
    %528 = vmatprep.subr.mxu0 0.0
    %529 = vmatpush1.msra.mxu0 0.0
    %530 = vmatprep.subr.mxu0 0.0
    %531 = vmatpush1.msra.mxu0 0.0
    %532 = vmatprep.subr.mxu0 0.0
    %533 = vmatpush1.msra.mxu0 0.0
    %534 = vmatprep.subr.mxu0 0.0
    %535 = vmatpush1.msra.mxu0 0.0
    %536 = vmatprep.subr.mxu0 0.0
    %537 = vmatpush1.msra.mxu0 0.0
    %538 = vmatprep.subr.mxu0 0.0
    %539 = vmatpush1.msra.mxu0 0.0
    %540 = vmatprep.subr.mxu0 0.0
    %541 = vmatpush1.msra.mxu0 0.0
    %542 = vmatprep.subr.mxu0 0.0
    %543 = vmatpush1.msra.mxu0 0.0
    %544 = vmatprep.subr.mxu0 0.0
    %545 = vmatpush1.msra.mxu0 0.0
    %546 = vmatprep.subr.mxu0 0.0
    %547 = vmatpush1.msra.mxu0 %v521
    %548 = vmatprep.subr.mxu0 0.0
    %549 = vmatpush1.msra.mxu0 %v520
    %550 = vmatprep.subr.mxu0 0.0
    %551 = vmatpush1.msra.mxu0 %v519
    %552 = vmatprep.subr.mxu0 0.0
    %553 = vmatpush1.msra.mxu0 %v518
    %554 = vmatprep.subr.mxu0 0.0
    %555 = vmatpush2.msra.mxu0 0.0
    %556 = vmatprep.subr.mxu0 0.0
    %557 = vmatpush2.msra.mxu0 0.0
    %558 = vmatprep.subr.mxu0 0.0
    %559 = vmatpush2.msra.mxu0 0.0
    %560 = vmatprep.subr.mxu0 0.0
    %561 = vmatpush2.msra.mxu0 0.0
    %562 = vmatprep.subr.mxu0 0.0
    %563 = vmatpush2.msra.mxu0 0.0
    %564 = vmatprep.subr.mxu0 0.0
    %565 = vmatpush2.msra.mxu0 0.0
    %566 = vmatprep.subr.mxu0 0.0
    %567 = vmatpush2.msra.mxu0 0.0
    %568 = vmatprep.subr.mxu0 0.0
    %569 = vmatpush2.msra.mxu0 0.0
    %570 = vmatprep.subr.mxu0 0.0
    %571 = vmatpush2.msra.mxu0 0.0
    %572 = vmatprep.subr.mxu0 0.0
    %573 = vmatpush2.msra.mxu0 0.0
    %574 = vmatprep.subr.mxu0 0.0
    %575 = vmatpush2.msra.mxu0 0.0
    %576 = vmatprep.subr.mxu0 0.0
    %577 = vmatpush2.msra.mxu0 0.0
    %578 = vmatprep.subr.mxu0 0.0
    %579 = vmatpush2.msra.mxu0 0.0
    %580 = vmatprep.subr.mxu0 0.0
    %581 = vmatpush2.msra.mxu0 0.0
    %582 = vmatprep.subr.mxu0 0.0
    %583 = vmatpush2.msra.mxu0 0.0
    %584 = vmatprep.subr.mxu0 0.0
    %585 = vmatpush2.msra.mxu0 0.0
    %586 = vmatprep.mubr.f32.mxu0 0.0
    %587 = vmatmul.mubr.f32.gmra.mxu0 %v446
    %v588 = vpop.f32.mrf.mxu0
    %v589 = vadd.f32 0.0, %v588
    %v590 = vpop.f32.mrf.mxu0
    %591 = vdwg.mxu0
    %v592 = vld [vmem:[#allocation2 + $0x80] sm:$0xff]
    %v593 = vld [vmem:[#allocation2 + $0x88] sm:$0xff]
    %v594 = vld [vmem:[#allocation2 + $0x90] sm:$0xff]
    %v595 = vld [vmem:[#allocation2 + $0x98] sm:$0xff]
    %v596 = vld [vmem:[#allocation2 + $0xa0] sm:$0x1]
    %v597 = vlaneseq
    %v598 = vshrl.u32 %v597, 7
    %v599 = vsub.s32 0, %v598
    %v600 = vrot.slane %v596, %v599
    %v602 = vsel %vm136, %v515, 0
    %604 = vmatprep.subr.mxu0 0.0
    %605 = vmatpush1.msra.mxu0 0.0
    %606 = vmatprep.subr.mxu0 0.0
    %607 = vmatpush1.msra.mxu0 0.0
    %608 = vmatprep.subr.mxu0 0.0
    %609 = vmatpush1.msra.mxu0 0.0
    %610 = vmatprep.subr.mxu0 0.0
    %611 = vmatpush1.msra.mxu0 0.0
    %612 = vmatprep.subr.mxu0 0.0
    %613 = vmatpush1.msra.mxu0 0.0
    %614 = vmatprep.subr.mxu0 0.0
    %615 = vmatpush1.msra.mxu0 0.0
    %616 = vmatprep.subr.mxu0 0.0
    %617 = vmatpush1.msra.mxu0 0.0
    %618 = vmatprep.subr.mxu0 0.0
    %619 = vmatpush1.msra.mxu0 0.0
    %620 = vmatprep.subr.mxu0 0.0
    %621 = vmatpush1.msra.mxu0 0.0
    %622 = vmatprep.subr.mxu0 0.0
    %623 = vmatpush1.msra.mxu0 0.0
    %624 = vmatprep.subr.mxu0 0.0
    %625 = vmatpush1.msra.mxu0 0.0
    %626 = vmatprep.subr.mxu0 0.0
    %627 = vmatpush1.msra.mxu0 0.0
    %628 = vmatprep.subr.mxu0 0.0
    %629 = vmatpush1.msra.mxu0 %v595
    %630 = vmatprep.subr.mxu0 0.0
    %631 = vmatpush1.msra.mxu0 %v594
    %632 = vmatprep.subr.mxu0 0.0
    %633 = vmatpush1.msra.mxu0 %v593
    %634 = vmatprep.subr.mxu0 0.0
    %635 = vmatpush1.msra.mxu0 %v592
    %636 = vmatprep.subr.mxu0 0.0
    %637 = vmatpush2.msra.mxu0 0.0
    %638 = vmatprep.subr.mxu0 0.0
    %639 = vmatpush2.msra.mxu0 0.0
    %640 = vmatprep.subr.mxu0 0.0
    %641 = vmatpush2.msra.mxu0 0.0
    %642 = vmatprep.subr.mxu0 0.0
    %643 = vmatpush2.msra.mxu0 0.0
    %644 = vmatprep.subr.mxu0 0.0
    %645 = vmatpush2.msra.mxu0 0.0
    %646 = vmatprep.subr.mxu0 0.0
    %647 = vmatpush2.msra.mxu0 0.0
    %648 = vmatprep.subr.mxu0 0.0
    %649 = vmatpush2.msra.mxu0 0.0
    %650 = vmatprep.subr.mxu0 0.0
    %651 = vmatpush2.msra.mxu0 0.0
    %652 = vmatprep.subr.mxu0 0.0
    %653 = vmatpush2.msra.mxu0 0.0
    %654 = vmatprep.subr.mxu0 0.0
    %655 = vmatpush2.msra.mxu0 0.0
    %656 = vmatprep.subr.mxu0 0.0
    %657 = vmatpush2.msra.mxu0 0.0
    %658 = vmatprep.subr.mxu0 0.0
    %659 = vmatpush2.msra.mxu0 0.0
    %660 = vmatprep.subr.mxu0 0.0
    %661 = vmatpush2.msra.mxu0 0.0
    %662 = vmatprep.subr.mxu0 0.0
    %663 = vmatpush2.msra.mxu0 0.0
    %664 = vmatprep.subr.mxu0 0.0
    %665 = vmatpush2.msra.mxu0 0.0
    %666 = vmatprep.subr.mxu0 0.0
    %667 = vmatpush2.msra.mxu0 0.0
    %668 = vmatprep.mubr.f32.mxu0 0.0
    %669 = vmatmul.mubr.f32.gmra.mxu0 %v602
    %v670 = vpop.f32.mrf.mxu0
    %v671 = vadd.f32 %v600, %v670
    %v672 = vpop.f32.mrf.mxu0
    %673 = vdwg.mxu0
    %v674 = vld [vmem:[#allocation2 + $0x110] sm:$0x3]
    %vm675 = vcmask 64512
    %v677 = vsel %vm675, %v674, 0
    %679 = vmatprep.subr.mxu0 0.0
    %680 = vmatpush1.msra.mxu0 0.0
    %681 = vmatprep.subr.mxu0 0.0
    %682 = vmatpush1.msra.mxu0 0.0
    %683 = vmatprep.subr.mxu0 0.0
    %684 = vmatpush1.msra.mxu0 0.0
    %685 = vmatprep.subr.mxu0 0.0
    %686 = vmatpush1.msra.mxu0 0.0
    %687 = vmatprep.subr.mxu0 0.0
    %688 = vmatpush1.msra.mxu0 0.0
    %689 = vmatprep.subr.mxu0 0.0
    %690 = vmatpush1.msra.mxu0 0.0
    %691 = vmatprep.subr.mxu0 0.0
    %692 = vmatpush1.msra.mxu0 0.0
    %693 = vmatprep.subr.mxu0 0.0
    %694 = vmatpush1.msra.mxu0 0.0
    %695 = vmatprep.subr.mxu0 0.0
    %696 = vmatpush1.msra.mxu0 0.0
    %697 = vmatprep.subr.mxu0 0.0
    %698 = vmatpush1.msra.mxu0 0.0
    %699 = vmatprep.subr.mxu0 0.0
    %700 = vmatpush1.msra.mxu0 0.0
    %701 = vmatprep.subr.mxu0 0.0
    %702 = vmatpush1.msra.mxu0 0.0
    %703 = vmatprep.subr.mxu0 0.0
    %704 = vmatpush1.msra.mxu0 0.0
    %705 = vmatprep.subr.mxu0 0.0
    %706 = vmatpush1.msra.mxu0 0.0
    %707 = vmatprep.subr.mxu0 0.0
    %708 = vmatpush1.msra.mxu0 0.0
    %709 = vmatprep.subr.mxu0 0.0
    %710 = vmatpush1.msra.mxu0 %v671
    %711 = vmatprep.subr.mxu0 0.0
    %712 = vmatpush2.msra.mxu0 0.0
    %713 = vmatprep.subr.mxu0 0.0
    %714 = vmatpush2.msra.mxu0 0.0
    %715 = vmatprep.subr.mxu0 0.0
    %716 = vmatpush2.msra.mxu0 0.0
    %717 = vmatprep.subr.mxu0 0.0
    %718 = vmatpush2.msra.mxu0 0.0
    %719 = vmatprep.subr.mxu0 0.0
    %720 = vmatpush2.msra.mxu0 0.0
    %721 = vmatprep.subr.mxu0 0.0
    %722 = vmatpush2.msra.mxu0 0.0
    %723 = vmatprep.subr.mxu0 0.0
    %724 = vmatpush2.msra.mxu0 0.0
    %725 = vmatprep.subr.mxu0 0.0
    %726 = vmatpush2.msra.mxu0 0.0
    %727 = vmatprep.subr.mxu0 0.0
    %728 = vmatpush2.msra.mxu0 0.0
    %729 = vmatprep.subr.mxu0 0.0
    %730 = vmatpush2.msra.mxu0 0.0
    %731 = vmatprep.subr.mxu0 0.0
    %732 = vmatpush2.msra.mxu0 0.0
    %733 = vmatprep.subr.mxu0 0.0
    %734 = vmatpush2.msra.mxu0 0.0
    %735 = vmatprep.subr.mxu0 0.0
    %736 = vmatpush2.msra.mxu0 0.0
    %737 = vmatprep.subr.mxu0 0.0
    %738 = vmatpush2.msra.mxu0 0.0
    %739 = vmatprep.subr.mxu0 0.0
    %740 = vmatpush2.msra.mxu0 0.0
    %741 = vmatprep.subr.mxu0 0.0
    %742 = vmatpush2.msra.mxu0 0.0
    %743 = vmatprep.mubr.f32.mxu0 0.0
    %744 = vmatmul.mubr.f32.gmra.mxu0 %v677
    %v745 = vpop.f32.mrf.mxu0
    %v746 = vadd.f32 0.0, %v745
    %v747 = vpop.f32.mrf.mxu0
    %748 = vdwg.mxu0
    %v749 = vld [vmem:[#allocation2 + $0x118] sm:$0xff]
    %v750 = vld [vmem:[#allocation2 + $0x120] sm:$0xff]
    %v751 = vld [vmem:[#allocation2 + $0x128] sm:$0xff]
    %v752 = vld [vmem:[#allocation2 + $0x130] sm:$0xff]
    %v753 = vld [vmem:[#allocation2 + $0x138] sm:$0x1]
    %v754 = vlaneseq
    %v755 = vshrl.u32 %v754, 7
    %v756 = vsub.s32 0, %v755
    %v757 = vrot.slane %v753, %v756
    %v759 = vsel %vm136, %v746, 0
    %761 = vmatprep.subr.mxu0 0.0
    %762 = vmatpush1.msra.mxu0 0.0
    %763 = vmatprep.subr.mxu0 0.0
    %764 = vmatpush1.msra.mxu0 0.0
    %765 = vmatprep.subr.mxu0 0.0
    %766 = vmatpush1.msra.mxu0 0.0
    %767 = vmatprep.subr.mxu0 0.0
    %768 = vmatpush1.msra.mxu0 0.0
    %769 = vmatprep.subr.mxu0 0.0
    %770 = vmatpush1.msra.mxu0 0.0
    %771 = vmatprep.subr.mxu0 0.0
    %772 = vmatpush1.msra.mxu0 0.0
    %773 = vmatprep.subr.mxu0 0.0
    %774 = vmatpush1.msra.mxu0 0.0
    %775 = vmatprep.subr.mxu0 0.0
    %776 = vmatpush1.msra.mxu0 0.0
    %777 = vmatprep.subr.mxu0 0.0
    %778 = vmatpush1.msra.mxu0 0.0
    %779 = vmatprep.subr.mxu0 0.0
    %780 = vmatpush1.msra.mxu0 0.0
    %781 = vmatprep.subr.mxu0 0.0
    %782 = vmatpush1.msra.mxu0 0.0
    %783 = vmatprep.subr.mxu0 0.0
    %784 = vmatpush1.msra.mxu0 0.0
    %785 = vmatprep.subr.mxu0 0.0
    %786 = vmatpush1.msra.mxu0 %v752
    %787 = vmatprep.subr.mxu0 0.0
    %788 = vmatpush1.msra.mxu0 %v751
    %789 = vmatprep.subr.mxu0 0.0
    %790 = vmatpush1.msra.mxu0 %v750
    %791 = vmatprep.subr.mxu0 0.0
    %792 = vmatpush1.msra.mxu0 %v749
    %793 = vmatprep.subr.mxu0 0.0
    %794 = vmatpush2.msra.mxu0 0.0
    %795 = vmatprep.subr.mxu0 0.0
    %796 = vmatpush2.msra.mxu0 0.0
    %797 = vmatprep.subr.mxu0 0.0
    %798 = vmatpush2.msra.mxu0 0.0
    %799 = vmatprep.subr.mxu0 0.0
    %800 = vmatpush2.msra.mxu0 0.0
    %801 = vmatprep.subr.mxu0 0.0
    %802 = vmatpush2.msra.mxu0 0.0
    %803 = vmatprep.subr.mxu0 0.0
    %804 = vmatpush2.msra.mxu0 0.0
    %805 = vmatprep.subr.mxu0 0.0
    %806 = vmatpush2.msra.mxu0 0.0
    %807 = vmatprep.subr.mxu0 0.0
    %808 = vmatpush2.msra.mxu0 0.0
    %809 = vmatprep.subr.mxu0 0.0
    %810 = vmatpush2.msra.mxu0 0.0
    %811 = vmatprep.subr.mxu0 0.0
    %812 = vmatpush2.msra.mxu0 0.0
    %813 = vmatprep.subr.mxu0 0.0
    %814 = vmatpush2.msra.mxu0 0.0
    %815 = vmatprep.subr.mxu0 0.0
    %816 = vmatpush2.msra.mxu0 0.0
    %817 = vmatprep.subr.mxu0 0.0
    %818 = vmatpush2.msra.mxu0 0.0
    %819 = vmatprep.subr.mxu0 0.0
    %820 = vmatpush2.msra.mxu0 0.0
    %821 = vmatprep.subr.mxu0 0.0
    %822 = vmatpush2.msra.mxu0 0.0
    %823 = vmatprep.subr.mxu0 0.0
    %824 = vmatpush2.msra.mxu0 0.0
    %825 = vmatprep.mubr.f32.mxu0 0.0
    %826 = vmatmul.mubr.f32.gmra.mxu0 %v759
    %v827 = vpop.f32.mrf.mxu0
    %v828 = vadd.f32 %v757, %v827
    %v829 = vpop.f32.mrf.mxu0
    %830 = vdwg.mxu0
    %vm831 = vcmask 517120
    %v832 = vsel %vm831, %v828, 0.0
    %833 = vadd.xlane.f32.xlu0 %v832
    %v834 = vpop.xlane.xlu0 %833
    %v835 = vrcp.pop 64.0
    %v836 = vmul.f32 %v834, %v835
    %v837 = vsub.f32 %v828, %v836
    %v838 = vmul.f32 %v837, %v837
    %v839 = vsel %vm831, %v838, 0.0
    %840 = vadd.xlane.f32.xlu0 %v839
    %v841 = vpop.xlane.xlu0 %840
    %v842 = vmul.f32 %v841, %v835
    %v843 = vadd.f32 %v842, 1e-05
    %v844 = vrsqrt.pop %v843
    %v845 = vmul.f32 %v837, %v844
    %v846 = vld [vmem:[#allocation2 + $0x140] sm:$0x1]
    %v847 = vlaneseq
    %v848 = vshrl.u32 %v847, 7
    %v849 = vsub.s32 0, %v848
    %v850 = vrot.slane %v846, %v849
    %v851 = vmul.f32 %v845, %v850
    %v852 = vld [vmem:[#allocation2 + $0x148] sm:$0x1]
    %v853 = vlaneseq
    %v854 = vshrl.u32 %v853, 7
    %v855 = vsub.s32 0, %v854
    %v856 = vrot.slane %v852, %v855
    %v857 = vadd.f32 %v851, %v856
    %v858 = vmax.f32 %v857, 0.0
    %v859 = vld [vmem:[#allocation2 + $0x150] sm:$0xff]
    %v860 = vld [vmem:[#allocation2 + $0x158] sm:$0xff]
    %v861 = vld [vmem:[#allocation2 + $0x160] sm:$0xff]
    %v862 = vld [vmem:[#allocation2 + $0x168] sm:$0xff]
    %v863 = vld [vmem:[#allocation2 + $0x170] sm:$0xff]
    %v864 = vld [vmem:[#allocation2 + $0x178] sm:$0xff]
    %v865 = vld [vmem:[#allocation2 + $0x180] sm:$0xff]
    %v866 = vld [vmem:[#allocation2 + $0x188] sm:$0xff]
    %v867 = vld [vmem:[#allocation2 + $0x190] sm:$0x1]
    %v868 = vlaneseq
    %v869 = vshrl.u32 %v868, 7
    %v870 = vsub.s32 0, %v869
    %v871 = vrot.slane %v867, %v870
    %v873 = vsel %vm35, %v858, 0
    %875 = vmatprep.subr.mxu0 0.0
    %876 = vmatpush1.msra.mxu0 0.0
    %877 = vmatprep.subr.mxu0 0.0
    %878 = vmatpush1.msra.mxu0 0.0
    %879 = vmatprep.subr.mxu0 0.0
    %880 = vmatpush1.msra.mxu0 0.0
    %881 = vmatprep.subr.mxu0 0.0
    %882 = vmatpush1.msra.mxu0 0.0
    %883 = vmatprep.subr.mxu0 0.0
    %884 = vmatpush1.msra.mxu0 0.0
    %885 = vmatprep.subr.mxu0 0.0
    %886 = vmatpush1.msra.mxu0 0.0
    %887 = vmatprep.subr.mxu0 0.0
    %888 = vmatpush1.msra.mxu0 0.0
    %889 = vmatprep.subr.mxu0 0.0
    %890 = vmatpush1.msra.mxu0 0.0
    %891 = vmatprep.subr.mxu0 0.0
    %892 = vmatpush1.msra.mxu0 %v866
    %893 = vmatprep.subr.mxu0 0.0
    %894 = vmatpush1.msra.mxu0 %v865
    %895 = vmatprep.subr.mxu0 0.0
    %896 = vmatpush1.msra.mxu0 %v864
    %897 = vmatprep.subr.mxu0 0.0
    %898 = vmatpush1.msra.mxu0 %v863
    %899 = vmatprep.subr.mxu0 0.0
    %900 = vmatpush1.msra.mxu0 %v862
    %901 = vmatprep.subr.mxu0 0.0
    %902 = vmatpush1.msra.mxu0 %v861
    %903 = vmatprep.subr.mxu0 0.0
    %904 = vmatpush1.msra.mxu0 %v860
    %905 = vmatprep.subr.mxu0 0.0
    %906 = vmatpush1.msra.mxu0 %v859
    %907 = vmatprep.subr.mxu0 0.0
    %908 = vmatpush2.msra.mxu0 0.0
    %909 = vmatprep.subr.mxu0 0.0
    %910 = vmatpush2.msra.mxu0 0.0
    %911 = vmatprep.subr.mxu0 0.0
    %912 = vmatpush2.msra.mxu0 0.0
    %913 = vmatprep.subr.mxu0 0.0
    %914 = vmatpush2.msra.mxu0 0.0
    %915 = vmatprep.subr.mxu0 0.0
    %916 = vmatpush2.msra.mxu0 0.0
    %917 = vmatprep.subr.mxu0 0.0
    %918 = vmatpush2.msra.mxu0 0.0
    %919 = vmatprep.subr.mxu0 0.0
    %920 = vmatpush2.msra.mxu0 0.0
    %921 = vmatprep.subr.mxu0 0.0
    %922 = vmatpush2.msra.mxu0 0.0
    %923 = vmatprep.subr.mxu0 0.0
    %924 = vmatpush2.msra.mxu0 0.0
    %925 = vmatprep.subr.mxu0 0.0
    %926 = vmatpush2.msra.mxu0 0.0
    %927 = vmatprep.subr.mxu0 0.0
    %928 = vmatpush2.msra.mxu0 0.0
    %929 = vmatprep.subr.mxu0 0.0
    %930 = vmatpush2.msra.mxu0 0.0
    %931 = vmatprep.subr.mxu0 0.0
    %932 = vmatpush2.msra.mxu0 0.0
    %933 = vmatprep.subr.mxu0 0.0
    %934 = vmatpush2.msra.mxu0 0.0
    %935 = vmatprep.subr.mxu0 0.0
    %936 = vmatpush2.msra.mxu0 0.0
    %937 = vmatprep.subr.mxu0 0.0
    %938 = vmatpush2.msra.mxu0 0.0
    %939 = vmatprep.mubr.f32.mxu0 0.0
    %940 = vmatmul.mubr.f32.gmra.mxu0 %v873
    %v941 = vpop.f32.mrf.mxu0
    %v942 = vadd.f32 %v871, %v941
    %v943 = vpop.f32.mrf.mxu0
    %944 = vdwg.mxu0
    %vm945 = vcmask 254976
    %v946 = vsel %vm945, %v942, 0.0
    %947 = vadd.xlane.f32.xlu0 %v946
    %v948 = vpop.xlane.xlu0 %947
    %v949 = vrcp.pop 32.0
    %v950 = vmul.f32 %v948, %v949
    %v951 = vsub.f32 %v942, %v950
    %v952 = vmul.f32 %v951, %v951
    %v953 = vsel %vm945, %v952, 0.0
    %954 = vadd.xlane.f32.xlu0 %v953
    %v955 = vpop.xlane.xlu0 %954
    %v956 = vmul.f32 %v955, %v949
    %v957 = vadd.f32 %v956, 1e-05
    %v958 = vrsqrt.pop %v957
    %v959 = vmul.f32 %v951, %v958
    %v960 = vld [vmem:[#allocation2 + $0x198] sm:$0x1]
    %v961 = vlaneseq
    %v962 = vshrl.u32 %v961, 7
    %v963 = vsub.s32 0, %v962
    %v964 = vrot.slane %v960, %v963
    %v965 = vmul.f32 %v959, %v964
    %v966 = vld [vmem:[#allocation2 + $0x1a0] sm:$0x1]
    %v967 = vlaneseq
    %v968 = vshrl.u32 %v967, 7
    %v969 = vsub.s32 0, %v968
    %v970 = vrot.slane %v966, %v969
    %v971 = vadd.f32 %v965, %v970
    %v972 = vld [vmem:[#allocation2 + $0x1a8] sm:$0xff]
    %v973 = vld [vmem:[#allocation2 + $0x1b0] sm:$0xff]
    %v974 = vld [vmem:[#allocation2 + $0x1b8] sm:$0xff]
    %v975 = vld [vmem:[#allocation2 + $0x1c0] sm:$0xff]
    %v976 = vld [vmem:[#allocation2 + $0x1c8] sm:$0x1]
    %v977 = vlaneseq
    %v978 = vshrl.u32 %v977, 7
    %v979 = vsub.s32 0, %v978
    %v980 = vrot.slane %v976, %v979
    %v982 = vsel %vm136, %v971, 0
    %984 = vmatprep.subr.mxu0 0.0
    %985 = vmatpush1.msra.mxu0 0.0
    %986 = vmatprep.subr.mxu0 0.0
    %987 = vmatpush1.msra.mxu0 0.0
    %988 = vmatprep.subr.mxu0 0.0
    %989 = vmatpush1.msra.mxu0 0.0
    %990 = vmatprep.subr.mxu0 0.0
    %991 = vmatpush1.msra.mxu0 0.0
    %992 = vmatprep.subr.mxu0 0.0
    %993 = vmatpush1.msra.mxu0 0.0
    %994 = vmatprep.subr.mxu0 0.0
    %995 = vmatpush1.msra.mxu0 0.0
    %996 = vmatprep.subr.mxu0 0.0
    %997 = vmatpush1.msra.mxu0 0.0
    %998 = vmatprep.subr.mxu0 0.0
    %999 = vmatpush1.msra.mxu0 0.0
    %1000 = vmatprep.subr.mxu0 0.0
    %1001 = vmatpush1.msra.mxu0 0.0
    %1002 = vmatprep.subr.mxu0 0.0
    %1003 = vmatpush1.msra.mxu0 0.0
    %1004 = vmatprep.subr.mxu0 0.0
    %1005 = vmatpush1.msra.mxu0 0.0
    %1006 = vmatprep.subr.mxu0 0.0
    %1007 = vmatpush1.msra.mxu0 0.0
    %1008 = vmatprep.subr.mxu0 0.0
    %1009 = vmatpush1.msra.mxu0 %v975
    %1010 = vmatprep.subr.mxu0 0.0
    %1011 = vmatpush1.msra.mxu0 %v974
    %1012 = vmatprep.subr.mxu0 0.0
    %1013 = vmatpush1.msra.mxu0 %v973
    %1014 = vmatprep.subr.mxu0 0.0
    %1015 = vmatpush1.msra.mxu0 %v972
    %1016 = vmatprep.subr.mxu0 0.0
    %1017 = vmatpush2.msra.mxu0 0.0
    %1018 = vmatprep.subr.mxu0 0.0
    %1019 = vmatpush2.msra.mxu0 0.0
    %1020 = vmatprep.subr.mxu0 0.0
    %1021 = vmatpush2.msra.mxu0 0.0
    %1022 = vmatprep.subr.mxu0 0.0
    %1023 = vmatpush2.msra.mxu0 0.0
    %1024 = vmatprep.subr.mxu0 0.0
    %1025 = vmatpush2.msra.mxu0 0.0
    %1026 = vmatprep.subr.mxu0 0.0
    %1027 = vmatpush2.msra.mxu0 0.0
    %1028 = vmatprep.subr.mxu0 0.0
    %1029 = vmatpush2.msra.mxu0 0.0
    %1030 = vmatprep.subr.mxu0 0.0
    %1031 = vmatpush2.msra.mxu0 0.0
    %1032 = vmatprep.subr.mxu0 0.0
    %1033 = vmatpush2.msra.mxu0 0.0
    %1034 = vmatprep.subr.mxu0 0.0
    %1035 = vmatpush2.msra.mxu0 0.0
    %1036 = vmatprep.subr.mxu0 0.0
    %1037 = vmatpush2.msra.mxu0 0.0
    %1038 = vmatprep.subr.mxu0 0.0
    %1039 = vmatpush2.msra.mxu0 0.0
    %1040 = vmatprep.subr.mxu0 0.0
    %1041 = vmatpush2.msra.mxu0 0.0
    %1042 = vmatprep.subr.mxu0 0.0
    %1043 = vmatpush2.msra.mxu0 0.0
    %1044 = vmatprep.subr.mxu0 0.0
    %1045 = vmatpush2.msra.mxu0 0.0
    %1046 = vmatprep.subr.mxu0 0.0
    %1047 = vmatpush2.msra.mxu0 0.0
    %1048 = vmatprep.mubr.f32.mxu0 0.0
    %1049 = vmatmul.mubr.f32.gmra.mxu0 %v982
    %v1050 = vpop.f32.mrf.mxu0
    %v1051 = vadd.f32 %v980, %v1050
    %v1052 = vpop.f32.mrf.mxu0
    %1053 = vdwg.mxu0
    %v1054 = vsel %vm945, %v1051, 0.0
    %1055 = vadd.xlane.f32.xlu0 %v1054
    %v1056 = vpop.xlane.xlu0 %1055
    %v1057 = vmul.f32 %v1056, %v949
    %v1058 = vsub.f32 %v1051, %v1057
    %v1059 = vmul.f32 %v1058, %v1058
    %v1060 = vsel %vm945, %v1059, 0.0
    %1061 = vadd.xlane.f32.xlu0 %v1060
    %v1062 = vpop.xlane.xlu0 %1061
    %v1063 = vmul.f32 %v1062, %v949
    %v1064 = vadd.f32 %v1063, 1e-05
    %v1065 = vrsqrt.pop %v1064
    %v1066 = vmul.f32 %v1058, %v1065
    %v1067 = vld [vmem:[#allocation2 + $0x1d0] sm:$0x1]
    %v1068 = vlaneseq
    %v1069 = vshrl.u32 %v1068, 7
    %v1070 = vsub.s32 0, %v1069
    %v1071 = vrot.slane %v1067, %v1070
    %v1072 = vmul.f32 %v1066, %v1071
    %v1073 = vld [vmem:[#allocation2 + $0x1d8] sm:$0x1]
    %v1074 = vlaneseq
    %v1075 = vshrl.u32 %v1074, 7
    %v1076 = vsub.s32 0, %v1075
    %v1077 = vrot.slane %v1073, %v1076
    %v1078 = vadd.f32 %v1072, %v1077
    %v1079 = vmax.f32 %v1078, 0.0
    %v1080 = vld [vmem:[#allocation2 + $0x1e0] sm:$0xff]
    %v1081 = vld [vmem:[#allocation2 + $0x1e8] sm:$0xff]
    %v1082 = vld [vmem:[#allocation2 + $0x1f0] sm:$0xff]
    %v1083 = vld [vmem:[#allocation2 + $0x1f8] sm:$0xff]
    %v1084 = vld [vmem:[#allocation2 + $0x200] sm:$0x1]
    %v1085 = vlaneseq
    %v1086 = vshrl.u32 %v1085, 7
    %v1087 = vsub.s32 0, %v1086
    %v1088 = vrot.slane %v1084, %v1087
    %v1090 = vsel %vm136, %v1079, 0
    %1092 = vmatprep.subr.mxu0 0.0
    %1093 = vmatpush1.msra.mxu0 0.0
    %1094 = vmatprep.subr.mxu0 0.0
    %1095 = vmatpush1.msra.mxu0 0.0
    %1096 = vmatprep.subr.mxu0 0.0
    %1097 = vmatpush1.msra.mxu0 0.0
    %1098 = vmatprep.subr.mxu0 0.0
    %1099 = vmatpush1.msra.mxu0 0.0
    %1100 = vmatprep.subr.mxu0 0.0
    %1101 = vmatpush1.msra.mxu0 0.0
    %1102 = vmatprep.subr.mxu0 0.0
    %1103 = vmatpush1.msra.mxu0 0.0
    %1104 = vmatprep.subr.mxu0 0.0
    %1105 = vmatpush1.msra.mxu0 0.0
    %1106 = vmatprep.subr.mxu0 0.0
    %1107 = vmatpush1.msra.mxu0 0.0
    %1108 = vmatprep.subr.mxu0 0.0
    %1109 = vmatpush1.msra.mxu0 0.0
    %1110 = vmatprep.subr.mxu0 0.0
    %1111 = vmatpush1.msra.mxu0 0.0
    %1112 = vmatprep.subr.mxu0 0.0
    %1113 = vmatpush1.msra.mxu0 0.0
    %1114 = vmatprep.subr.mxu0 0.0
    %1115 = vmatpush1.msra.mxu0 0.0
    %1116 = vmatprep.subr.mxu0 0.0
    %1117 = vmatpush1.msra.mxu0 %v1083
    %1118 = vmatprep.subr.mxu0 0.0
    %1119 = vmatpush1.msra.mxu0 %v1082
    %1120 = vmatprep.subr.mxu0 0.0
    %1121 = vmatpush1.msra.mxu0 %v1081
    %1122 = vmatprep.subr.mxu0 0.0
    %1123 = vmatpush1.msra.mxu0 %v1080
    %1124 = vmatprep.subr.mxu0 0.0
    %1125 = vmatpush2.msra.mxu0 0.0
    %1126 = vmatprep.subr.mxu0 0.0
    %1127 = vmatpush2.msra.mxu0 0.0
    %1128 = vmatprep.subr.mxu0 0.0
    %1129 = vmatpush2.msra.mxu0 0.0
    %1130 = vmatprep.subr.mxu0 0.0
    %1131 = vmatpush2.msra.mxu0 0.0
    %1132 = vmatprep.subr.mxu0 0.0
    %1133 = vmatpush2.msra.mxu0 0.0
    %1134 = vmatprep.subr.mxu0 0.0
    %1135 = vmatpush2.msra.mxu0 0.0
    %1136 = vmatprep.subr.mxu0 0.0
    %1137 = vmatpush2.msra.mxu0 0.0
    %1138 = vmatprep.subr.mxu0 0.0
    %1139 = vmatpush2.msra.mxu0 0.0
    %1140 = vmatprep.subr.mxu0 0.0
    %1141 = vmatpush2.msra.mxu0 0.0
    %1142 = vmatprep.subr.mxu0 0.0
    %1143 = vmatpush2.msra.mxu0 0.0
    %1144 = vmatprep.subr.mxu0 0.0
    %1145 = vmatpush2.msra.mxu0 0.0
    %1146 = vmatprep.subr.mxu0 0.0
    %1147 = vmatpush2.msra.mxu0 0.0
    %1148 = vmatprep.subr.mxu0 0.0
    %1149 = vmatpush2.msra.mxu0 0.0
    %1150 = vmatprep.subr.mxu0 0.0
    %1151 = vmatpush2.msra.mxu0 0.0
    %1152 = vmatprep.subr.mxu0 0.0
    %1153 = vmatpush2.msra.mxu0 0.0
    %1154 = vmatprep.subr.mxu0 0.0
    %1155 = vmatpush2.msra.mxu0 0.0
    %1156 = vmatprep.mubr.f32.mxu0 0.0
    %1157 = vmatmul.mubr.f32.gmra.mxu0 %v1090
    %v1158 = vpop.f32.mrf.mxu0
    %v1159 = vadd.f32 %v1088, %v1158
    %v1160 = vpop.f32.mrf.mxu0
    %1161 = vdwg.mxu0
    %v1162 = vmax.f32 %v1159, 0.0
    %v1163 = vld [vmem:[#allocation2 + $0x208] sm:$0xff]
    %v1164 = vld [vmem:[#allocation2 + $0x210] sm:$0xff]
    %v1165 = vld [vmem:[#allocation2 + $0x218] sm:$0x1]
    %v1166 = vlaneseq
    %v1167 = vshrl.u32 %v1166, 7
    %v1168 = vsub.s32 0, %v1167
    %v1169 = vrot.slane %v1165, %v1168
    %vm1170 = vcmask 130048
    %v1172 = vsel %vm1170, %v1162, 0
    %1174 = vmatprep.subr.mxu0 0.0
    %1175 = vmatpush1.msra.mxu0 0.0
    %1176 = vmatprep.subr.mxu0 0.0
    %1177 = vmatpush1.msra.mxu0 0.0
    %1178 = vmatprep.subr.mxu0 0.0
    %1179 = vmatpush1.msra.mxu0 0.0
    %1180 = vmatprep.subr.mxu0 0.0
    %1181 = vmatpush1.msra.mxu0 0.0
    %1182 = vmatprep.subr.mxu0 0.0
    %1183 = vmatpush1.msra.mxu0 0.0
    %1184 = vmatprep.subr.mxu0 0.0
    %1185 = vmatpush1.msra.mxu0 0.0
    %1186 = vmatprep.subr.mxu0 0.0
    %1187 = vmatpush1.msra.mxu0 0.0
    %1188 = vmatprep.subr.mxu0 0.0
    %1189 = vmatpush1.msra.mxu0 0.0
    %1190 = vmatprep.subr.mxu0 0.0
    %1191 = vmatpush1.msra.mxu0 0.0
    %1192 = vmatprep.subr.mxu0 0.0
    %1193 = vmatpush1.msra.mxu0 0.0
    %1194 = vmatprep.subr.mxu0 0.0
    %1195 = vmatpush1.msra.mxu0 0.0
    %1196 = vmatprep.subr.mxu0 0.0
    %1197 = vmatpush1.msra.mxu0 0.0
    %1198 = vmatprep.subr.mxu0 0.0
    %1199 = vmatpush1.msra.mxu0 0.0
    %1200 = vmatprep.subr.mxu0 0.0
    %1201 = vmatpush1.msra.mxu0 0.0
    %1202 = vmatprep.subr.mxu0 0.0
    %1203 = vmatpush1.msra.mxu0 %v1164
    %1204 = vmatprep.subr.mxu0 0.0
    %1205 = vmatpush1.msra.mxu0 %v1163
    %1206 = vmatprep.subr.mxu0 0.0
    %1207 = vmatpush2.msra.mxu0 0.0
    %1208 = vmatprep.subr.mxu0 0.0
    %1209 = vmatpush2.msra.mxu0 0.0
    %1210 = vmatprep.subr.mxu0 0.0
    %1211 = vmatpush2.msra.mxu0 0.0
    %1212 = vmatprep.subr.mxu0 0.0
    %1213 = vmatpush2.msra.mxu0 0.0
    %1214 = vmatprep.subr.mxu0 0.0
    %1215 = vmatpush2.msra.mxu0 0.0
    %1216 = vmatprep.subr.mxu0 0.0
    %1217 = vmatpush2.msra.mxu0 0.0
    %1218 = vmatprep.subr.mxu0 0.0
    %1219 = vmatpush2.msra.mxu0 0.0
    %1220 = vmatprep.subr.mxu0 0.0
    %1221 = vmatpush2.msra.mxu0 0.0
    %1222 = vmatprep.subr.mxu0 0.0
    %1223 = vmatpush2.msra.mxu0 0.0
    %1224 = vmatprep.subr.mxu0 0.0
    %1225 = vmatpush2.msra.mxu0 0.0
    %1226 = vmatprep.subr.mxu0 0.0
    %1227 = vmatpush2.msra.mxu0 0.0
    %1228 = vmatprep.subr.mxu0 0.0
    %1229 = vmatpush2.msra.mxu0 0.0
    %1230 = vmatprep.subr.mxu0 0.0
    %1231 = vmatpush2.msra.mxu0 0.0
    %1232 = vmatprep.subr.mxu0 0.0
    %1233 = vmatpush2.msra.mxu0 0.0
    %1234 = vmatprep.subr.mxu0 0.0
    %1235 = vmatpush2.msra.mxu0 0.0
    %1236 = vmatprep.subr.mxu0 0.0
    %1237 = vmatpush2.msra.mxu0 0.0
    %1238 = vmatprep.mubr.f32.mxu0 0.0
    %1239 = vmatmul.mubr.f32.gmra.mxu0 %v1172
    %v1240 = vpop.f32.mrf.mxu0
    %v1241 = vadd.f32 %v1169, %v1240
    %v1242 = vpop.f32.mrf.mxu0
    %1243 = vdwg.mxu0
    %v1244 = vxor.u32 %v1241, 2147483648
    %v1245 = vmul.f32 %v1244, 1.442695
    %v1246 = vpow.pop %v1245
    %v1247 = vadd.f32 %v1246, 1.0
    %v1248 = vrcp.pop %v1247
    %v1249 = vmul.f32 1.0, %v1248
    %1250 = vst [vmem:[%s2] sm:$0xff] 0.0
    %1251 = vst.msk [vmem:[%s2] sm:$0xff] %vm675, %v589
    %1252 = vrot.lane.b32.xlu0 %v971, 32
    %v1253 = vpop.permute.xlu0 %1252
    %vm1255 = vcmask 517376
    %1256 = vst.msk [vmem:[%s2] sm:$0x3] %vm1255, %v1253
    %1258 = vrot.lane.b32.xlu0 %v1249, 64
    %v1259 = vpop.permute.xlu0 %1258
    %vm1261 = vcmask 525824
    %1262 = vst.msk [vmem:[%s2] sm:$0x3] %vm1261, %v1259
    // Predicated region
    $region14: #{forward.1} parent=1 // pred_check
      _
    $region15: #{forward.1} parent=1 // pred_check_branch
      %1264 = sbr.rel (0) target = $region17
    $region16: #{forward.1} parent=1 // pred_region
      _
    $region17: #{forward.1} parent=1 // pred_fallthru
      _
    // Predicated region
    $region18: #{forward.1} parent=1 // pred_check
      _
    $region19: #{forward.1} parent=1 // pred_check_branch
      %1266 = sbr.rel (0) target = $region21
    $region20: #{forward.1} parent=1 // pred_region
      _
    $region21: #{forward.1} parent=1 // pred_fallthru
      _
    %1267 = vsyncpa [#allocation3], 1

</llo_original>
